<compile_context>
chip_gen: v7x
topology: tpu7x:2x2x1
jax: 0.10.0
libtpu: 0.0.40
codegen_flags: <defaults>
</compile_context>

<pallas_src>
import functools

import jax
import jax.numpy as jnp
from jax.experimental import pallas as pl
from jax.experimental.pallas import tpu as pltpu


_LAYER_DIMS = [(19, 10), (10, 20), (20, 10), (10, 5), (5, 1)]   # (fan_in, fan_out)
_MACS_PER_SAMPLE = sum(i * o for i, o in _LAYER_DIMS)            # 645


def _round_up(n, m):
    return ((n + m - 1) // m) * m


def _mlp_kernel(x_ref,
                w1_ref, b1_ref,
                w2_ref, b2_ref,
                w3_ref, b3_ref,
                w4_ref, b4_ref,
                w5_ref, b5_ref,
                o_ref, *, precision):
    # x tile: (19, TB), batch on the lane axis.  Upcast to f32 so all
    # accumulation / activation math is f32 regardless of the streamed dtype.
    x = x_ref[...].astype(jnp.float32)

    # Layer 1: (10,19) @ (19,TB) -> (10,TB), ReLU
    y = jnp.dot(w1_ref[...], x, precision=precision,
                preferred_element_type=jnp.float32) + b1_ref[...]
    y = jnp.maximum(y, 0.0)

    # Layer 2: (20,10) @ (10,TB) -> (20,TB), ReLU
    y = jnp.dot(w2_ref[...], y, precision=precision,
                preferred_element_type=jnp.float32) + b2_ref[...]
    y = jnp.maximum(y, 0.0)

    # Layer 3: (10,20) @ (20,TB) -> (10,TB), ReLU
    y = jnp.dot(w3_ref[...], y, precision=precision,
                preferred_element_type=jnp.float32) + b3_ref[...]
    y = jnp.maximum(y, 0.0)

    # Layer 4: (5,10) @ (10,TB) -> (5,TB), ReLU
    y = jnp.dot(w4_ref[...], y, precision=precision,
                preferred_element_type=jnp.float32) + b4_ref[...]
    y = jnp.maximum(y, 0.0)

    # Output layer: (1,5) @ (5,TB) -> (1,TB), sigmoid.  Lane-dense store.
    y = jnp.dot(w5_ref[...], y, precision=precision,
                preferred_element_type=jnp.float32) + b5_ref[...]
    o_ref[...] = jax.nn.sigmoid(y).astype(o_ref.dtype)


# Max batch tile.  32768 lanes keeps per-step DMA ~1.2 MB (bf16) / 2.5 MB (f32)
# -- large vs the ~0.35 us per-step overhead -- while per-step VMEM stays
# ~10-15 MiB: safe on v5e (16 MiB scoped default is overridden below), v6e, and
# v7x (64 MiB physical, both cores allocating).
_TB_MAX = 32768


def _choose_tile_b(batch, tb_max=_TB_MAX):
    """Batch tile: multiple of 128, <= tb_max, and >=2 (even count of) tiles for
    non-tiny batches so v7x's two TensorCores both get work on the 'parallel'
    grid axis (harmless on v5e/v6e)."""
    b128 = _round_up(max(int(batch), 1), 128)
    if b128 <= tb_max:
        num_tiles = 2 if b128 >= 8192 else 1
    else:
        num_tiles = pl.cdiv(b128, tb_max)
        num_tiles += num_tiles % 2          # even tile count splits evenly over 2 cores
    return _round_up(pl.cdiv(b128, num_tiles), 128)


def reference_forward(x, params):
    """Pure-JAX reference mirroring the PyTorch module (full-f32 matmuls).

    Also used as the small-batch fast path."""
    y = x.astype(jnp.float32)
    for i, (w, b) in enumerate(params):
        y = jnp.dot(y, w.T, precision=jax.lax.Precision.HIGHEST) + b
        if i < len(params) - 1:
            y = jnp.maximum(y, 0.0)
    return jax.nn.sigmoid(y)


def iris_bcf_forward(x, params, *,
                     feature_major=False,
                     cast_input_to_bf16=None,
                     tile_b=None,
                     min_pallas_batch=4096,
                     precision=jax.lax.Precision.HIGHEST):
    """Forward pass of IrisBCFModel.

    x: (B, 19) float32 (or (19, B) if feature_major=True, which skips the
       wrapper relayout copy entirely).
    params: list of (W, b) in PyTorch nn.Linear layout: W is (out, in), b is (out,).
    cast_input_to_bf16: default True for the batch-major kernel path (cast is
       fused into the transpose copy, halving its write and the kernel's HBM
       read; compute stays f32).  Pass False for exact PyTorch float32 numerics.
    Returns (B, 1) float32, matching torch.sigmoid(out_layer(...)).
    """
    if feature_major:
        F, B = x.shape
    else:
        B, F = x.shape
    assert F == 19, f"expected 19 input features, got {F}"

    # Tiny batches: kernel launch + relayout are pure fixed overhead -> XLA path.
    if (not feature_major) and B < min_pallas_batch:
        return reference_forward(x, params)

    if cast_input_to_bf16 is None:
        # Free only when fused into the already-needed transpose copy; for
        # feature-major input there is no copy to fuse into, so keep dtype as-is.
        cast_input_to_bf16 = not feature_major

    if tile_b is None:
        tb = _choose_tile_b(B)
    else:
        tb = _round_up(int(tile_b), 128)
    b_pad = _round_up(B, tb)
    num_tiles = b_pad // tb

    # ---- Input relayout (batch on the 128-lane axis) ------------------------
    if feature_major:
        x_t = x if b_pad == B else jnp.pad(x, ((0, 0), (0, b_pad - B)))
        if cast_input_to_bf16 and x_t.dtype != jnp.bfloat16:
            x_t = x_t.astype(jnp.bfloat16)
    else:
        x_p = x
        if cast_input_to_bf16 and x_p.dtype != jnp.bfloat16:
            # Cast BEFORE the transpose so the relayout copy's write is half-size.
            x_p = x_p.astype(jnp.bfloat16)
        if b_pad != B:
            x_p = jnp.pad(x_p, ((0, b_pad - B), (0, 0)))
        x_t = x_p.T     # XLA fuses cast + pad + transpose into a single copy.

    # ---- Params: native (out, in) layout; biases as (out, 1) columns --------
    flat = []
    for w, b in params:
        flat.append(jnp.asarray(w, jnp.float32))
        flat.append(jnp.asarray(b, jnp.float32).reshape(-1, 1))

    # Batch-tiled input/output specs; weights/biases use constant index maps so
    # they are DMA'd once and stay VMEM-resident across all grid steps.
    x_spec = pl.BlockSpec((19, tb), lambda i: (0, i))
    const_specs = [pl.BlockSpec(a.shape, lambda i: (0, 0)) for a in flat]
    out_spec = pl.BlockSpec((1, tb), lambda i: (0, i))

    param_bytes = sum(int(a.size) * a.dtype.itemsize for a in flat)
    cost = pl.CostEstimate(
        flops=2 * _MACS_PER_SAMPLE * b_pad,
        transcendentals=b_pad,                      # sigmoid exp
        bytes_accessed=int(x_t.size) * x_t.dtype.itemsize + 4 * b_pad + param_bytes,
    )

    kernel = functools.partial(_mlp_kernel, precision=precision)

    out_t = pl.pallas_call(
        kernel,
        out_shape=jax.ShapeDtypeStruct((1, b_pad), jnp.float32),
        grid=(num_tiles,),
        in_specs=[x_spec] + const_specs,
        out_specs=out_spec,
        compiler_params=pltpu.CompilerParams(
            dimension_semantics=("parallel",),       # shard batch axis across TCs (v7x)
            vmem_limit_bytes=48 * 1024 * 1024,       # > v5e's 16 MiB default, < v7x physical
        ),
        cost_estimate=cost,
    )(x_t, *flat)

    # (1, B_pad) -> (B, 1)
    return out_t[:, :B].T


def init_params(key):
    """Deterministic init mimicking nn.Linear (uniform +-1/sqrt(fan_in)), PyTorch layout."""
    params = []
    for fan_in, fan_out in _LAYER_DIMS:
        key, kw, kb = jax.random.split(key, 3)
        bound = 1.0 / jnp.sqrt(float(fan_in))
        w = jax.random.uniform(kw, (fan_out, fan_in), jnp.float32, -bound, bound)
        b = jax.random.uniform(kb, (fan_out,), jnp.float32, -bound, bound)
        params.append((w, b))
    return params


if __name__ == "__main__":
    key = jax.random.PRNGKey(0)
    key, kx = jax.random.split(key)
    params = init_params(key)

    # 1) Small batch forced through the kernel, exact f32 path (PyTorch semantics).
    B = 8
    x = jax.random.normal(kx, (B, 19), jnp.float32)
    out = jax.block_until_ready(
        iris_bcf_forward(x, params, cast_input_to_bf16=False, min_pallas_batch=0))
    ref = reference_forward(x, params)
    assert out.shape == (B, 1)
    assert jnp.allclose(out, ref, atol=1e-5, rtol=1e-5)

    # 2) Default bf16-input kernel path (cast fused into the transpose copy).
    out_bf16 = jax.block_until_ready(iris_bcf_forward(x, params, min_pallas_batch=0))
    ref_bf16 = reference_forward(x.astype(jnp.bfloat16).astype(jnp.float32), params)
    assert jnp.allclose(out_bf16, ref_bf16, atol=5e-3, rtol=5e-3)

    # 3) Non-tile-multiple batch + explicit small tile: multi-step pipelined grid.
    key, kx2 = jax.random.split(key)
    B2 = 1000
    x2 = jax.random.normal(kx2, (B2, 19), jnp.float32)
    out2 = jax.block_until_ready(
        iris_bcf_forward(x2, params, cast_input_to_bf16=False,
                         tile_b=256, min_pallas_batch=0))
    ref2 = reference_forward(x2, params)
    assert out2.shape == (B2, 1)
    assert jnp.allclose(out2, ref2, atol=1e-5, rtol=1e-5)

    # 4) Feature-major (19, B) caller path: zero wrapper relayout copies.
    out2_fm = jax.block_until_ready(
        iris_bcf_forward(x2.T, params, feature_major=True, tile_b=256))
    assert out2_fm.shape == (B2, 1)
    assert jnp.allclose(out2_fm, ref2, atol=1e-5, rtol=1e-5)

    # 5) Default entry point: small batch takes the XLA fast path.
    out_small = jax.block_until_ready(iris_bcf_forward(x, params))
    assert jnp.allclose(out_small, ref, atol=1e-6, rtol=1e-6)

    # 6) Default entry point at a kernel-sized batch: auto tiling (>=2 tiles), bf16 stream.
    key, kx3 = jax.random.split(key)
    B3 = 20000
    x3 = jax.random.normal(kx3, (B3, 19), jnp.float32)
    out3 = jax.block_until_ready(iris_bcf_forward(x3, params))
    ref3 = reference_forward(x3.astype(jnp.bfloat16).astype(jnp.float32), params)
    assert out3.shape == (B3, 1)
    assert jnp.allclose(out3, ref3, atol=5e-3, rtol=5e-3)

    print("KERNEL_OK")
</pallas_src>

<mosaic_0001>
module attributes {stable_mosaic.version = 11 : i64} {
  func.func @_mlp_kernel(%arg0: i32, %arg1: memref<19x128xf32, #tpu.memory_space<vmem>>, %arg2: memref<10x19xf32, #tpu.memory_space<vmem>>, %arg3: memref<10x1xf32, #tpu.memory_space<vmem>>, %arg4: memref<20x10xf32, #tpu.memory_space<vmem>>, %arg5: memref<20x1xf32, #tpu.memory_space<vmem>>, %arg6: memref<10x20xf32, #tpu.memory_space<vmem>>, %arg7: memref<10x1xf32, #tpu.memory_space<vmem>>, %arg8: memref<5x10xf32, #tpu.memory_space<vmem>>, %arg9: memref<5x1xf32, #tpu.memory_space<vmem>>, %arg10: memref<1x5xf32, #tpu.memory_space<vmem>>, %arg11: memref<1x1xf32, #tpu.memory_space<vmem>>, %arg12: memref<1x128xf32, #tpu.memory_space<vmem>>) attributes {dimension_semantics = [#tpu.dimension_semantics<parallel>], iteration_bounds = array<i64: 1>, scalar_prefetch = 0 : i64, scratch_operands = 0 : i64, tpu.core_type = #tpu.core_type<tc>, window_params = [{transform_indices = @transform_0, window_bounds = array<i64: 19, 128>}, {pipeline_mode = #tpu.pipeline_mode<synchronous>, transform_indices = @transform_1, window_bounds = array<i64: 10, 19>}, {pipeline_mode = #tpu.pipeline_mode<synchronous>, transform_indices = @transform_2, window_bounds = array<i64: 10, 1>}, {pipeline_mode = #tpu.pipeline_mode<synchronous>, transform_indices = @transform_3, window_bounds = array<i64: 20, 10>}, {pipeline_mode = #tpu.pipeline_mode<synchronous>, transform_indices = @transform_4, window_bounds = array<i64: 20, 1>}, {pipeline_mode = #tpu.pipeline_mode<synchronous>, transform_indices = @transform_5, window_bounds = array<i64: 10, 20>}, {pipeline_mode = #tpu.pipeline_mode<synchronous>, transform_indices = @transform_6, window_bounds = array<i64: 10, 1>}, {pipeline_mode = #tpu.pipeline_mode<synchronous>, transform_indices = @transform_7, window_bounds = array<i64: 5, 10>}, {pipeline_mode = #tpu.pipeline_mode<synchronous>, transform_indices = @transform_8, window_bounds = array<i64: 5, 1>}, {pipeline_mode = #tpu.pipeline_mode<synchronous>, transform_indices = @transform_9, window_bounds = array<i64: 1, 5>}, {pipeline_mode = #tpu.pipeline_mode<synchronous>, transform_indices = @transform_10, window_bounds = array<i64: 1, 1>}, {transform_indices = @transform_11, window_bounds = array<i64: 1, 128>}]} {
    %c0 = arith.constant 0 : index
    %c0_0 = arith.constant 0 : index
    %0 = vector.load %arg1[%c0, %c0_0] : memref<19x128xf32, #tpu.memory_space<vmem>>, vector<19x128xf32>
    %c0_1 = arith.constant 0 : index
    %c0_2 = arith.constant 0 : index
    %1 = vector.load %arg2[%c0_1, %c0_2] : memref<10x19xf32, #tpu.memory_space<vmem>>, vector<10x19xf32>
    %cst = arith.constant dense<0.000000e+00> : vector<10x128xf32>
    %2 = tpu.matmul %1, %0, %cst {dimension_numbers = #tpu.dot_dimension_numbers<[1], [0], [0], [1], [0, 0, 1, 1], [], []>, precision = #tpu.contract_precision<fp32>} : vector<10x19xf32>, vector<19x128xf32>, vector<10x128xf32> -> vector<10x128xf32>
    %c0_3 = arith.constant 0 : index
    %c0_4 = arith.constant 0 : index
    %3 = vector.load %arg3[%c0_3, %c0_4] : memref<10x1xf32, #tpu.memory_space<vmem>>, vector<10x1xf32>
    %4 = vector.broadcast %3 : vector<10x1xf32> to vector<10x128xf32>
    %5 = arith.addf %2, %4 : vector<10x128xf32>
    %cst_5 = arith.constant 0.000000e+00 : f32
    %6 = vector.broadcast %cst_5 : f32 to vector<10x128xf32>
    %7 = arith.maximumf %5, %6 : vector<10x128xf32>
    %c0_6 = arith.constant 0 : index
    %c0_7 = arith.constant 0 : index
    %8 = vector.load %arg4[%c0_6, %c0_7] : memref<20x10xf32, #tpu.memory_space<vmem>>, vector<20x10xf32>
    %cst_8 = arith.constant dense<0.000000e+00> : vector<20x128xf32>
    %9 = tpu.matmul %8, %7, %cst_8 {dimension_numbers = #tpu.dot_dimension_numbers<[1], [0], [0], [1], [0, 0, 1, 1], [], []>, precision = #tpu.contract_precision<fp32>} : vector<20x10xf32>, vector<10x128xf32>, vector<20x128xf32> -> vector<20x128xf32>
    %c0_9 = arith.constant 0 : index
    %c0_10 = arith.constant 0 : index
    %10 = vector.load %arg5[%c0_9, %c0_10] : memref<20x1xf32, #tpu.memory_space<vmem>>, vector<20x1xf32>
    %11 = vector.broadcast %10 : vector<20x1xf32> to vector<20x128xf32>
    %12 = arith.addf %9, %11 : vector<20x128xf32>
    %cst_11 = arith.constant 0.000000e+00 : f32
    %13 = vector.broadcast %cst_11 : f32 to vector<20x128xf32>
    %14 = arith.maximumf %12, %13 : vector<20x128xf32>
    %c0_12 = arith.constant 0 : index
    %c0_13 = arith.constant 0 : index
    %15 = vector.load %arg6[%c0_12, %c0_13] : memref<10x20xf32, #tpu.memory_space<vmem>>, vector<10x20xf32>
    %cst_14 = arith.constant dense<0.000000e+00> : vector<10x128xf32>
    %16 = tpu.matmul %15, %14, %cst_14 {dimension_numbers = #tpu.dot_dimension_numbers<[1], [0], [0], [1], [0, 0, 1, 1], [], []>, precision = #tpu.contract_precision<fp32>} : vector<10x20xf32>, vector<20x128xf32>, vector<10x128xf32> -> vector<10x128xf32>
    %c0_15 = arith.constant 0 : index
    %c0_16 = arith.constant 0 : index
    %17 = vector.load %arg7[%c0_15, %c0_16] : memref<10x1xf32, #tpu.memory_space<vmem>>, vector<10x1xf32>
    %18 = vector.broadcast %17 : vector<10x1xf32> to vector<10x128xf32>
    %19 = arith.addf %16, %18 : vector<10x128xf32>
    %cst_17 = arith.constant 0.000000e+00 : f32
    %20 = vector.broadcast %cst_17 : f32 to vector<10x128xf32>
    %21 = arith.maximumf %19, %20 : vector<10x128xf32>
    %c0_18 = arith.constant 0 : index
    %c0_19 = arith.constant 0 : index
    %22 = vector.load %arg8[%c0_18, %c0_19] : memref<5x10xf32, #tpu.memory_space<vmem>>, vector<5x10xf32>
    %cst_20 = arith.constant dense<0.000000e+00> : vector<5x128xf32>
    %23 = tpu.matmul %22, %21, %cst_20 {dimension_numbers = #tpu.dot_dimension_numbers<[1], [0], [0], [1], [0, 0, 1, 1], [], []>, precision = #tpu.contract_precision<fp32>} : vector<5x10xf32>, vector<10x128xf32>, vector<5x128xf32> -> vector<5x128xf32>
    %c0_21 = arith.constant 0 : index
    %c0_22 = arith.constant 0 : index
    %24 = vector.load %arg9[%c0_21, %c0_22] : memref<5x1xf32, #tpu.memory_space<vmem>>, vector<5x1xf32>
    %25 = vector.broadcast %24 : vector<5x1xf32> to vector<5x128xf32>
    %26 = arith.addf %23, %25 : vector<5x128xf32>
    %cst_23 = arith.constant 0.000000e+00 : f32
    %27 = vector.broadcast %cst_23 : f32 to vector<5x128xf32>
    %28 = arith.maximumf %26, %27 : vector<5x128xf32>
    %c0_24 = arith.constant 0 : index
    %c0_25 = arith.constant 0 : index
    %29 = vector.load %arg10[%c0_24, %c0_25] : memref<1x5xf32, #tpu.memory_space<vmem>>, vector<1x5xf32>
    %cst_26 = arith.constant dense<0.000000e+00> : vector<1x128xf32>
    %30 = tpu.matmul %29, %28, %cst_26 {dimension_numbers = #tpu.dot_dimension_numbers<[1], [0], [0], [1], [0, 0, 1, 1], [], []>, precision = #tpu.contract_precision<fp32>} : vector<1x5xf32>, vector<5x128xf32>, vector<1x128xf32> -> vector<1x128xf32>
    %c0_27 = arith.constant 0 : index
    %c0_28 = arith.constant 0 : index
    %31 = vector.load %arg11[%c0_27, %c0_28] : memref<1x1xf32, #tpu.memory_space<vmem>>, vector<1x1xf32>
    %32 = vector.broadcast %31 : vector<1x1xf32> to vector<1x128xf32>
    %33 = arith.addf %30, %32 : vector<1x128xf32>
    %34 = arith.negf %33 : vector<1x128xf32>
    %35 = math.exp %34 : vector<1x128xf32>
    %cst_29 = arith.constant 1.000000e+00 : f32
    %36 = vector.broadcast %cst_29 : f32 to vector<1x128xf32>
    %37 = arith.addf %36, %35 : vector<1x128xf32>
    %38 = arith.divf %36, %37 : vector<1x128xf32>
    %c0_30 = arith.constant 0 : index
    %c0_31 = arith.constant 0 : index
    %39 = vector.load %arg12[%c0_30, %c0_31] : memref<1x128xf32, #tpu.memory_space<vmem>>, vector<1x128xf32>
    tpu.vector_store %arg12[%c0_30, %c0_31], %38 {strides = array<i32>} : memref<1x128xf32, #tpu.memory_space<vmem>>, vector<1x128xf32>,
    return
  }
  func.func @transform_0(%arg0: i32) -> (i32, i32) {
    %c0_i32 = arith.constant 0 : i32
    %c0_i32_0 = arith.constant 0 : i32
    return %c0_i32, %arg0 : i32, i32
  }
  func.func @transform_1(%arg0: i32) -> (i32, i32) {
    %c0_i32 = arith.constant 0 : i32
    %c0_i32_0 = arith.constant 0 : i32
    %c0_i32_1 = arith.constant 0 : i32
    return %c0_i32, %c0_i32_0 : i32, i32
  }
  func.func @transform_2(%arg0: i32) -> (i32, i32) {
    %c0_i32 = arith.constant 0 : i32
    %c0_i32_0 = arith.constant 0 : i32
    %c0_i32_1 = arith.constant 0 : i32
    return %c0_i32, %c0_i32_0 : i32, i32
  }
  func.func @transform_3(%arg0: i32) -> (i32, i32) {
    %c0_i32 = arith.constant 0 : i32
    %c0_i32_0 = arith.constant 0 : i32
    %c0_i32_1 = arith.constant 0 : i32
    return %c0_i32, %c0_i32_0 : i32, i32
  }
  func.func @transform_4(%arg0: i32) -> (i32, i32) {
    %c0_i32 = arith.constant 0 : i32
    %c0_i32_0 = arith.constant 0 : i32
    %c0_i32_1 = arith.constant 0 : i32
    return %c0_i32, %c0_i32_0 : i32, i32
  }
  func.func @transform_5(%arg0: i32) -> (i32, i32) {
    %c0_i32 = arith.constant 0 : i32
    %c0_i32_0 = arith.constant 0 : i32
    %c0_i32_1 = arith.constant 0 : i32
    return %c0_i32, %c0_i32_0 : i32, i32
  }
  func.func @transform_6(%arg0: i32) -> (i32, i32) {
    %c0_i32 = arith.constant 0 : i32
    %c0_i32_0 = arith.constant 0 : i32
    %c0_i32_1 = arith.constant 0 : i32
    return %c0_i32, %c0_i32_0 : i32, i32
  }
  func.func @transform_7(%arg0: i32) -> (i32, i32) {
    %c0_i32 = arith.constant 0 : i32
    %c0_i32_0 = arith.constant 0 : i32
    %c0_i32_1 = arith.constant 0 : i32
    return %c0_i32, %c0_i32_0 : i32, i32
  }
  func.func @transform_8(%arg0: i32) -> (i32, i32) {
    %c0_i32 = arith.constant 0 : i32
    %c0_i32_0 = arith.constant 0 : i32
    %c0_i32_1 = arith.constant 0 : i32
    return %c0_i32, %c0_i32_0 : i32, i32
  }
  func.func @transform_9(%arg0: i32) -> (i32, i32) {
    %c0_i32 = arith.constant 0 : i32
    %c0_i32_0 = arith.constant 0 : i32
    %c0_i32_1 = arith.constant 0 : i32
    return %c0_i32, %c0_i32_0 : i32, i32
  }
  func.func @transform_10(%arg0: i32) -> (i32, i32) {
    %c0_i32 = arith.constant 0 : i32
    %c0_i32_0 = arith.constant 0 : i32
    %c0_i32_1 = arith.constant 0 : i32
    return %c0_i32, %c0_i32_0 : i32, i32
  }
  func.func @transform_11(%arg0: i32) -> (i32, i32) {
    %c0_i32 = arith.constant 0 : i32
    %c0_i32_0 = arith.constant 0 : i32
    return %c0_i32, %arg0 : i32, i32
  }
}

</mosaic_0001>

<llo_original>
// kernel: tpu_custom_call.1
$region0: #{tpu_custom_call.1}
  #allocation0 [shape = 'u32[]', space=smem, size = 0x4, offset = 0x4, fixed_abs, tag = 'smem constant byte address 0x4 - core index']
  #allocation1 [shape = 'u32[144,128]{1,0:T(1,128)}', space=vmem, size = 0x12000, scoped, tag = 'internal scratch']
  #allocation2 [shape = 'f32[1,1]{1,0:T(1,128)S(1)}', space=vmem, size = 0x200, scoped, tag = 'scoped memory for tpu_custom_call.1']
  %s0 = inlined_call_operand.vmem [shape: f32[19,128], index: 0, kind: input, shape index: {}]
  %s1 = inlined_call_operand.vmem [shape: f32[10,19], index: 1, kind: input, shape index: {}]
  %s2 = inlined_call_operand.vmem [shape: f32[10,1], index: 2, kind: input, shape index: {}]
  %s3 = inlined_call_operand.vmem [shape: f32[20,10], index: 3, kind: input, shape index: {}]
  %s4 = inlined_call_operand.vmem [shape: f32[20,1], index: 4, kind: input, shape index: {}]
  %s5 = inlined_call_operand.vmem [shape: f32[10,20], index: 5, kind: input, shape index: {}]
  %s6 = inlined_call_operand.vmem [shape: f32[10,1], index: 6, kind: input, shape index: {}]
  %s7 = inlined_call_operand.vmem [shape: f32[5,10], index: 7, kind: input, shape index: {}]
  %s8 = inlined_call_operand.vmem [shape: f32[5,1], index: 8, kind: input, shape index: {}]
  %s9 = inlined_call_operand.vmem [shape: f32[1,5], index: 9, kind: input, shape index: {}]
  %s10 = inlined_call_operand.<no memory space> [shape: f32[1,1], index: 10, kind: input, shape index: {}]
  %s11 = inlined_call_operand.hbm [shape: f32[1,128], index: 11, kind: output, shape index: {}]
  %s12 = sld [smem:[#allocation0]]
  $region54: #{tpu_custom_call.1} parent=0
    _
  %s14 = ssub.s32 1, %s12
  %s15 = scalar_select 0, %s14, %s12
  %v16 = vstv %s10
  %17 = vst [vmem:[#allocation2] sm:$0x1] %v16
  $region1: #{tpu_custom_call.1} parent=0
    #allocation3 [shape = 'u8[512]{0}', space=vmem, size = 0x400, scoped, tag = 'output window, operand 0, single buffered']
    #allocation4 [shape = 's32[1]{0}', space=sflag, size = 0x4, scoped, tag = 'scoped memory for tpu_custom_call.1']
    %18 = vsyncpa [#allocation4], 0
    // Predicated region
    $region2: #{tpu_custom_call.1} parent=1 // pred_check
      _
    $region3: #{tpu_custom_call.1} parent=1 // pred_check_branch
      %20 = sbr.rel (0) target = $region5
    $region4: #{tpu_custom_call.1} parent=1 // pred_region
      _
    $region5: #{tpu_custom_call.1} parent=1 // pred_fallthru
      _
    // Predicated region
    $region6: #{tpu_custom_call.1} parent=1 // pred_check
      _
    $region7: #{tpu_custom_call.1} parent=1 // pred_check_branch
      %22 = sbr.rel (0) target = $region9
    $region8: #{tpu_custom_call.1} parent=1 // pred_region
      _
    $region9: #{tpu_custom_call.1} parent=1 // pred_fallthru
      _
    // Predicated region
    $region10: #{tpu_custom_call.1} parent=1 // pred_check
      _
    $region11: #{tpu_custom_call.1} parent=1 // pred_check_branch
      %24 = sbr.rel (0) target = $region13
    $region12: #{tpu_custom_call.1} parent=1 // pred_region
      _
    $region13: #{tpu_custom_call.1} parent=1 // pred_fallthru
      _
    // Predicated region
    $region14: #{tpu_custom_call.1} parent=1 // pred_check
      _
    $region15: #{tpu_custom_call.1} parent=1 // pred_check_branch
      %26 = sbr.rel (0) target = $region17
    $region16: #{tpu_custom_call.1} parent=1 // pred_region
      _
    $region17: #{tpu_custom_call.1} parent=1 // pred_fallthru
      _
    // Predicated region
    $region18: #{tpu_custom_call.1} parent=1 // pred_check
      _
    $region19: #{tpu_custom_call.1} parent=1 // pred_check_branch
      %28 = sbr.rel (0) target = $region21
    $region20: #{tpu_custom_call.1} parent=1 // pred_region
      _
    $region21: #{tpu_custom_call.1} parent=1 // pred_fallthru
      _
    // Predicated region
    $region22: #{tpu_custom_call.1} parent=1 // pred_check
      _
    $region23: #{tpu_custom_call.1} parent=1 // pred_check_branch
      %30 = sbr.rel (0) target = $region25
    $region24: #{tpu_custom_call.1} parent=1 // pred_region
      _
    $region25: #{tpu_custom_call.1} parent=1 // pred_fallthru
      _
    // Predicated region
    $region26: #{tpu_custom_call.1} parent=1 // pred_check
      _
    $region27: #{tpu_custom_call.1} parent=1 // pred_check_branch
      %32 = sbr.rel (0) target = $region29
    $region28: #{tpu_custom_call.1} parent=1 // pred_region
      _
    $region29: #{tpu_custom_call.1} parent=1 // pred_fallthru
      _
    // Predicated region
    $region30: #{tpu_custom_call.1} parent=1 // pred_check
      _
    $region31: #{tpu_custom_call.1} parent=1 // pred_check_branch
      %34 = sbr.rel (0) target = $region33
    $region32: #{tpu_custom_call.1} parent=1 // pred_region
      _
    $region33: #{tpu_custom_call.1} parent=1 // pred_fallthru
      _
    // Predicated region
    $region34: #{tpu_custom_call.1} parent=1 // pred_check
      _
    $region35: #{tpu_custom_call.1} parent=1 // pred_check_branch
      %36 = sbr.rel (0) target = $region37
    $region36: #{tpu_custom_call.1} parent=1 // pred_region
      _
    $region37: #{tpu_custom_call.1} parent=1 // pred_fallthru
      _
    // Predicated region
    $region38: #{tpu_custom_call.1} parent=1 // pred_check
      _
    $region39: #{tpu_custom_call.1} parent=1 // pred_check_branch
      %38 = sbr.rel (0) target = $region41
    $region40: #{tpu_custom_call.1} parent=1 // pred_region
      _
    $region41: #{tpu_custom_call.1} parent=1 // pred_fallthru
      _
    // Predicated region
    $region42: #{tpu_custom_call.1} parent=1 // pred_check
      _
    $region43: #{tpu_custom_call.1} parent=1 // pred_check_branch
      %40 = sbr.rel (0) target = $region45
    $region44: #{tpu_custom_call.1} parent=1 // pred_region
      _
    $region45: #{tpu_custom_call.1} parent=1 // pred_fallthru
      _
    %v41 = vld [vmem:[%s0] sm:$0xff]
    %v42 = vld [vmem:[%s0 + $0x8] sm:$0xff]
    %v43 = vld [vmem:[%s0 + $0x10] sm:$0x7]
    %v44 = vld [vmem:[%s1] sm:$0xff]
    %v45 = vld [vmem:[%s1 + $0x8] sm:$0x3]
    %v46 = vld [vmem:[%s2] sm:$0xff]
    %v47 = vld [vmem:[%s2 + $0x8] sm:$0x3]
    %49 = vset.pattern.permute.xlu0 0
    %50 = vperm.xlu0 %49, %v46
    %v51 = vpop.permute.xlu0 %50
    %54 = vset.pattern.permute.xlu0 0
    %55 = vperm.xlu0 %54, %v47
    %v56 = vpop.permute.xlu0 %55
    %vm58 = vcmask 154624
    %v60 = vsel %vm58, %v44, 0
    %v63 = vsel %vm58, %v45, 0
    %vm65 = vcmask 1042432
    %v67 = vsel %vm65, %v43, 0
    %69 = vmatprep.subr.mxu0 0.0
    %v70 = vand.u32 %v41, 4294901760
    %71 = vmatpush1.msra.mxu0 %v70
    %72 = vmatprep.subr.mxu0 0.0
    %v73 = vand.u32 %v42, 4294901760
    %74 = vmatpush1.msra.mxu0 %v73
    %75 = vmatprep.subr.mxu0 0.0
    %v76 = vand.u32 %v67, 4294901760
    %77 = vmatpush1.msra.mxu0 %v76
    %78 = vmatprep.subr.mxu0 0.0
    %79 = vmatpush1.msra.mxu0 0.0
    %80 = vmatprep.subr.mxu0 0.0
    %81 = vmatpush1.msra.mxu0 0.0
    %82 = vmatprep.subr.mxu0 0.0
    %83 = vmatpush1.msra.mxu0 0.0
    %84 = vmatprep.subr.mxu0 0.0
    %85 = vmatpush1.msra.mxu0 0.0
    %86 = vmatprep.subr.mxu0 0.0
    %87 = vmatpush1.msra.mxu0 0.0
    %88 = vmatprep.subr.mxu0 0.0
    %89 = vmatpush1.msra.mxu0 0.0
    %90 = vmatprep.subr.mxu0 0.0
    %91 = vmatpush1.msra.mxu0 0.0
    %92 = vmatprep.subr.mxu0 0.0
    %93 = vmatpush1.msra.mxu0 0.0
    %94 = vmatprep.subr.mxu0 0.0
    %95 = vmatpush1.msra.mxu0 0.0
    %96 = vmatprep.subr.mxu0 0.0
    %97 = vmatpush1.msra.mxu0 0.0
    %98 = vmatprep.subr.mxu0 0.0
    %99 = vmatpush1.msra.mxu0 0.0
    %100 = vmatprep.subr.mxu0 0.0
    %101 = vmatpush1.msra.mxu0 0.0
    %102 = vmatprep.subr.mxu0 0.0
    %103 = vmatpush1.msra.mxu0 0.0
    %104 = vmatprep.subr.mxu0 0.0
    %105 = vmatpush1.msra.mxu0 0.0
    %106 = vmatprep.subr.mxu0 0.0
    %107 = vmatpush1.msra.mxu0 0.0
    %108 = vmatprep.subr.mxu0 0.0
    %109 = vmatpush1.msra.mxu0 0.0
    %110 = vmatprep.subr.mxu0 0.0
    %111 = vmatpush1.msra.mxu0 0.0
    %112 = vmatprep.subr.mxu0 0.0
    %113 = vmatpush1.msra.mxu0 0.0
    %114 = vmatprep.subr.mxu0 0.0
    %115 = vmatpush1.msra.mxu0 0.0
    %116 = vmatprep.subr.mxu0 0.0
    %117 = vmatpush1.msra.mxu0 0.0
    %118 = vmatprep.subr.mxu0 0.0
    %119 = vmatpush1.msra.mxu0 0.0
    %120 = vmatprep.subr.mxu0 0.0
    %121 = vmatpush1.msra.mxu0 0.0
    %122 = vmatprep.subr.mxu0 0.0
    %123 = vmatpush1.msra.mxu0 0.0
    %124 = vmatprep.subr.mxu0 0.0
    %125 = vmatpush1.msra.mxu0 0.0
    %126 = vmatprep.subr.mxu0 0.0
    %127 = vmatpush1.msra.mxu0 0.0
    %128 = vmatprep.subr.mxu0 0.0
    %129 = vmatpush1.msra.mxu0 0.0
    %130 = vmatprep.subr.mxu0 0.0
    %131 = vmatpush1.msra.mxu0 0.0
    %132 = vmatprep.subr.mxu0 0.0
    %133 = vmatpush1.msra.mxu0 0.0
    %134 = vmatprep.subr.mxu0 0.0
    %135 = vmatpush1.msra.mxu0 0.0
    %136 = vmatprep.mubr.f32.mxu0 0.0
    %v137 = vand.u32 %v60, 4294901760
    %v138 = vsub.f32 %v60, %v137
    %v139 = vand.u32 %v138, 4294901760
    %v140 = vsub.f32 %v138, %v139
    %v141 = vand.u32 %v140, 4294901760
    %142 = vmatmul.mubr.f32.gmra.mrb[0].mxu0 %v141
    %v143 = vpop.f32.mrb[0].mxu0
    %v144 = vadd.f32 %v51, %v143
    %v145 = vpop.f32.mrb[0].mxu0
    %146 = vmatprep.mubr.f32.mxu0 0.0
    %v147 = vand.u32 %v63, 4294901760
    %v148 = vsub.f32 %v63, %v147
    %v149 = vand.u32 %v148, 4294901760
    %v150 = vsub.f32 %v148, %v149
    %v151 = vand.u32 %v150, 4294901760
    %152 = vmatmul.mubr.f32.gmra.mrb[0].mxu0 %v151
    %v153 = vpop.f32.mrb[0].mxu0
    %v154 = vadd.f32 %v56, %v153
    %v155 = vpop.f32.mrb[0].mxu0
    %156 = vdwg.mxu0
    %157 = vmatprep.subr.mxu0 0.0
    %v158 = vand.u32 %v41, 4294901760
    %v159 = vsub.f32 %v41, %v158
    %v160 = vand.u32 %v159, 4294901760
    %v161 = vsub.f32 %v159, %v160
    %v162 = vand.u32 %v161, 4294901760
    %163 = vmatpush1.msra.mxu0 %v162
    %164 = vmatprep.subr.mxu0 0.0
    %v165 = vand.u32 %v42, 4294901760
    %v166 = vsub.f32 %v42, %v165
    %v167 = vand.u32 %v166, 4294901760
    %v168 = vsub.f32 %v166, %v167
    %v169 = vand.u32 %v168, 4294901760
    %170 = vmatpush1.msra.mxu0 %v169
    %171 = vmatprep.subr.mxu0 0.0
    %v172 = vand.u32 %v67, 4294901760
    %v173 = vsub.f32 %v67, %v172
    %v174 = vand.u32 %v173, 4294901760
    %v175 = vsub.f32 %v173, %v174
    %v176 = vand.u32 %v175, 4294901760
    %177 = vmatpush1.msra.mxu0 %v176
    %178 = vmatprep.subr.mxu0 0.0
    %179 = vmatpush1.msra.mxu0 0.0
    %180 = vmatprep.subr.mxu0 0.0
    %181 = vmatpush1.msra.mxu0 0.0
    %182 = vmatprep.subr.mxu0 0.0
    %183 = vmatpush1.msra.mxu0 0.0
    %184 = vmatprep.subr.mxu0 0.0
    %185 = vmatpush1.msra.mxu0 0.0
    %186 = vmatprep.subr.mxu0 0.0
    %187 = vmatpush1.msra.mxu0 0.0
    %188 = vmatprep.subr.mxu0 0.0
    %189 = vmatpush1.msra.mxu0 0.0
    %190 = vmatprep.subr.mxu0 0.0
    %191 = vmatpush1.msra.mxu0 0.0
    %192 = vmatprep.subr.mxu0 0.0
    %193 = vmatpush1.msra.mxu0 0.0
    %194 = vmatprep.subr.mxu0 0.0
    %195 = vmatpush1.msra.mxu0 0.0
    %196 = vmatprep.subr.mxu0 0.0
    %197 = vmatpush1.msra.mxu0 0.0
    %198 = vmatprep.subr.mxu0 0.0
    %199 = vmatpush1.msra.mxu0 0.0
    %200 = vmatprep.subr.mxu0 0.0
    %201 = vmatpush1.msra.mxu0 0.0
    %202 = vmatprep.subr.mxu0 0.0
    %203 = vmatpush1.msra.mxu0 0.0
    %204 = vmatprep.subr.mxu0 0.0
    %205 = vmatpush1.msra.mxu0 0.0
    %206 = vmatprep.subr.mxu0 0.0
    %207 = vmatpush1.msra.mxu0 0.0
    %208 = vmatprep.subr.mxu0 0.0
    %209 = vmatpush1.msra.mxu0 0.0
    %210 = vmatprep.subr.mxu0 0.0
    %211 = vmatpush1.msra.mxu0 0.0
    %212 = vmatprep.subr.mxu0 0.0
    %213 = vmatpush1.msra.mxu0 0.0
    %214 = vmatprep.subr.mxu0 0.0
    %215 = vmatpush1.msra.mxu0 0.0
    %216 = vmatprep.subr.mxu0 0.0
    %217 = vmatpush1.msra.mxu0 0.0
    %218 = vmatprep.subr.mxu0 0.0
    %219 = vmatpush1.msra.mxu0 0.0
    %220 = vmatprep.subr.mxu0 0.0
    %221 = vmatpush1.msra.mxu0 0.0
    %222 = vmatprep.subr.mxu0 0.0
    %223 = vmatpush1.msra.mxu0 0.0
    %224 = vmatprep.subr.mxu0 0.0
    %225 = vmatpush1.msra.mxu0 0.0
    %226 = vmatprep.subr.mxu0 0.0
    %227 = vmatpush1.msra.mxu0 0.0
    %228 = vmatprep.subr.mxu0 0.0
    %229 = vmatpush1.msra.mxu0 0.0
    %230 = vmatprep.subr.mxu0 0.0
    %231 = vmatpush1.msra.mxu0 0.0
    %232 = vmatprep.subr.mxu0 0.0
    %233 = vmatpush1.msra.mxu0 0.0
    %234 = vmatprep.subr.mxu0 0.0
    %235 = vmatpush1.msra.mxu0 0.0
    %236 = vmatprep.mubr.f32.mxu0 0.0
    %v237 = vand.u32 %v60, 4294901760
    %238 = vmatmul.mubr.f32.gmra.mrb[0].mxu0 %v237
    %v239 = vpop.f32.mrb[0].mxu0
    %v240 = vadd.f32 %v144, %v239
    %v241 = vpop.f32.mrb[0].mxu0
    %242 = vmatprep.mubr.f32.mxu0 0.0
    %v243 = vand.u32 %v63, 4294901760
    %244 = vmatmul.mubr.f32.gmra.mrb[0].mxu0 %v243
    %v245 = vpop.f32.mrb[0].mxu0
    %v246 = vadd.f32 %v154, %v245
    %v247 = vpop.f32.mrb[0].mxu0
    %248 = vdwg.mxu0
    %249 = vmatprep.subr.mxu0 0.0
    %v250 = vand.u32 %v41, 4294901760
    %v251 = vsub.f32 %v41, %v250
    %252 = vmatpush1.msra.mxu0 %v251
    %253 = vmatprep.subr.mxu0 0.0
    %v254 = vand.u32 %v42, 4294901760
    %v255 = vsub.f32 %v42, %v254
    %256 = vmatpush1.msra.mxu0 %v255
    %257 = vmatprep.subr.mxu0 0.0
    %v258 = vand.u32 %v67, 4294901760
    %v259 = vsub.f32 %v67, %v258
    %260 = vmatpush1.msra.mxu0 %v259
    %261 = vmatprep.subr.mxu0 0.0
    %262 = vmatpush1.msra.mxu0 0.0
    %263 = vmatprep.subr.mxu0 0.0
    %264 = vmatpush1.msra.mxu0 0.0
    %265 = vmatprep.subr.mxu0 0.0
    %266 = vmatpush1.msra.mxu0 0.0
    %267 = vmatprep.subr.mxu0 0.0
    %268 = vmatpush1.msra.mxu0 0.0
    %269 = vmatprep.subr.mxu0 0.0
    %270 = vmatpush1.msra.mxu0 0.0
    %271 = vmatprep.subr.mxu0 0.0
    %272 = vmatpush1.msra.mxu0 0.0
    %273 = vmatprep.subr.mxu0 0.0
    %274 = vmatpush1.msra.mxu0 0.0
    %275 = vmatprep.subr.mxu0 0.0
    %276 = vmatpush1.msra.mxu0 0.0
    %277 = vmatprep.subr.mxu0 0.0
    %278 = vmatpush1.msra.mxu0 0.0
    %279 = vmatprep.subr.mxu0 0.0
    %280 = vmatpush1.msra.mxu0 0.0
    %281 = vmatprep.subr.mxu0 0.0
    %282 = vmatpush1.msra.mxu0 0.0
    %283 = vmatprep.subr.mxu0 0.0
    %284 = vmatpush1.msra.mxu0 0.0
    %285 = vmatprep.subr.mxu0 0.0
    %286 = vmatpush1.msra.mxu0 0.0
    %287 = vmatprep.subr.mxu0 0.0
    %288 = vmatpush1.msra.mxu0 0.0
    %289 = vmatprep.subr.mxu0 0.0
    %290 = vmatpush1.msra.mxu0 0.0
    %291 = vmatprep.subr.mxu0 0.0
    %292 = vmatpush1.msra.mxu0 0.0
    %293 = vmatprep.subr.mxu0 0.0
    %294 = vmatpush1.msra.mxu0 0.0
    %295 = vmatprep.subr.mxu0 0.0
    %296 = vmatpush1.msra.mxu0 0.0
    %297 = vmatprep.subr.mxu0 0.0
    %298 = vmatpush1.msra.mxu0 0.0
    %299 = vmatprep.subr.mxu0 0.0
    %300 = vmatpush1.msra.mxu0 0.0
    %301 = vmatprep.subr.mxu0 0.0
    %302 = vmatpush1.msra.mxu0 0.0
    %303 = vmatprep.subr.mxu0 0.0
    %304 = vmatpush1.msra.mxu0 0.0
    %305 = vmatprep.subr.mxu0 0.0
    %306 = vmatpush1.msra.mxu0 0.0
    %307 = vmatprep.subr.mxu0 0.0
    %308 = vmatpush1.msra.mxu0 0.0
    %309 = vmatprep.subr.mxu0 0.0
    %310 = vmatpush1.msra.mxu0 0.0
    %311 = vmatprep.subr.mxu0 0.0
    %312 = vmatpush1.msra.mxu0 0.0
    %313 = vmatprep.subr.mxu0 0.0
    %314 = vmatpush1.msra.mxu0 0.0
    %315 = vmatprep.subr.mxu0 0.0
    %316 = vmatpush1.msra.mxu0 0.0
    %317 = vmatprep.subr.mxu0 0.0
    %318 = vmatpush1.msra.mxu0 0.0
    %319 = vmatprep.mubr.f32.mxu0 0.0
    %v320 = vand.u32 %v60, 4294901760
    %v321 = vsub.f32 %v60, %v320
    %322 = vmatmul.mubr.f32.gmra.mrb[0].mxu0 %v321
    %v323 = vpop.f32.mrb[0].mxu0
    %v324 = vadd.f32 %v240, %v323
    %v325 = vpop.f32.mrb[0].mxu0
    %326 = vmatprep.mubr.f32.mxu0 0.0
    %v327 = vand.u32 %v63, 4294901760
    %v328 = vsub.f32 %v63, %v327
    %329 = vmatmul.mubr.f32.gmra.mrb[0].mxu0 %v328
    %v330 = vpop.f32.mrb[0].mxu0
    %v331 = vadd.f32 %v246, %v330
    %v332 = vpop.f32.mrb[0].mxu0
    %333 = vdwg.mxu0
    %334 = vmatprep.subr.mxu0 0.0
    %v335 = vand.u32 %v41, 4294901760
    %336 = vmatpush1.msra.mxu0 %v335
    %337 = vmatprep.subr.mxu0 0.0
    %v338 = vand.u32 %v42, 4294901760
    %339 = vmatpush1.msra.mxu0 %v338
    %340 = vmatprep.subr.mxu0 0.0
    %v341 = vand.u32 %v67, 4294901760
    %342 = vmatpush1.msra.mxu0 %v341
    %343 = vmatprep.subr.mxu0 0.0
    %344 = vmatpush1.msra.mxu0 0.0
    %345 = vmatprep.subr.mxu0 0.0
    %346 = vmatpush1.msra.mxu0 0.0
    %347 = vmatprep.subr.mxu0 0.0
    %348 = vmatpush1.msra.mxu0 0.0
    %349 = vmatprep.subr.mxu0 0.0
    %350 = vmatpush1.msra.mxu0 0.0
    %351 = vmatprep.subr.mxu0 0.0
    %352 = vmatpush1.msra.mxu0 0.0
    %353 = vmatprep.subr.mxu0 0.0
    %354 = vmatpush1.msra.mxu0 0.0
    %355 = vmatprep.subr.mxu0 0.0
    %356 = vmatpush1.msra.mxu0 0.0
    %357 = vmatprep.subr.mxu0 0.0
    %358 = vmatpush1.msra.mxu0 0.0
    %359 = vmatprep.subr.mxu0 0.0
    %360 = vmatpush1.msra.mxu0 0.0
    %361 = vmatprep.subr.mxu0 0.0
    %362 = vmatpush1.msra.mxu0 0.0
    %363 = vmatprep.subr.mxu0 0.0
    %364 = vmatpush1.msra.mxu0 0.0
    %365 = vmatprep.subr.mxu0 0.0
    %366 = vmatpush1.msra.mxu0 0.0
    %367 = vmatprep.subr.mxu0 0.0
    %368 = vmatpush1.msra.mxu0 0.0
    %369 = vmatprep.subr.mxu0 0.0
    %370 = vmatpush1.msra.mxu0 0.0
    %371 = vmatprep.subr.mxu0 0.0
    %372 = vmatpush1.msra.mxu0 0.0
    %373 = vmatprep.subr.mxu0 0.0
    %374 = vmatpush1.msra.mxu0 0.0
    %375 = vmatprep.subr.mxu0 0.0
    %376 = vmatpush1.msra.mxu0 0.0
    %377 = vmatprep.subr.mxu0 0.0
    %378 = vmatpush1.msra.mxu0 0.0
    %379 = vmatprep.subr.mxu0 0.0
    %380 = vmatpush1.msra.mxu0 0.0
    %381 = vmatprep.subr.mxu0 0.0
    %382 = vmatpush1.msra.mxu0 0.0
    %383 = vmatprep.subr.mxu0 0.0
    %384 = vmatpush1.msra.mxu0 0.0
    %385 = vmatprep.subr.mxu0 0.0
    %386 = vmatpush1.msra.mxu0 0.0
    %387 = vmatprep.subr.mxu0 0.0
    %388 = vmatpush1.msra.mxu0 0.0
    %389 = vmatprep.subr.mxu0 0.0
    %390 = vmatpush1.msra.mxu0 0.0
    %391 = vmatprep.subr.mxu0 0.0
    %392 = vmatpush1.msra.mxu0 0.0
    %393 = vmatprep.subr.mxu0 0.0
    %394 = vmatpush1.msra.mxu0 0.0
    %395 = vmatprep.subr.mxu0 0.0
    %396 = vmatpush1.msra.mxu0 0.0
    %397 = vmatprep.subr.mxu0 0.0
    %398 = vmatpush1.msra.mxu0 0.0
    %399 = vmatprep.subr.mxu0 0.0
    %400 = vmatpush1.msra.mxu0 0.0
    %401 = vmatprep.mubr.f32.mxu0 0.0
    %v402 = vand.u32 %v60, 4294901760
    %v403 = vsub.f32 %v60, %v402
    %v404 = vand.u32 %v403, 4294901760
    %405 = vmatmul.mubr.f32.gmra.mrb[0].mxu0 %v404
    %v406 = vpop.f32.mrb[0].mxu0
    %v407 = vadd.f32 %v324, %v406
    %v408 = vpop.f32.mrb[0].mxu0
    %409 = vmatprep.mubr.f32.mxu0 0.0
    %v410 = vand.u32 %v63, 4294901760
    %v411 = vsub.f32 %v63, %v410
    %v412 = vand.u32 %v411, 4294901760
    %413 = vmatmul.mubr.f32.gmra.mrb[0].mxu0 %v412
    %v414 = vpop.f32.mrb[0].mxu0
    %v415 = vadd.f32 %v331, %v414
    %v416 = vpop.f32.mrb[0].mxu0
    %417 = vdwg.mxu0
    %418 = vmatprep.subr.mxu0 0.0
    %v419 = vand.u32 %v41, 4294901760
    %v420 = vsub.f32 %v41, %v419
    %v421 = vand.u32 %v420, 4294901760
    %422 = vmatpush1.msra.mxu0 %v421
    %423 = vmatprep.subr.mxu0 0.0
    %v424 = vand.u32 %v42, 4294901760
    %v425 = vsub.f32 %v42, %v424
    %v426 = vand.u32 %v425, 4294901760
    %427 = vmatpush1.msra.mxu0 %v426
    %428 = vmatprep.subr.mxu0 0.0
    %v429 = vand.u32 %v67, 4294901760
    %v430 = vsub.f32 %v67, %v429
    %v431 = vand.u32 %v430, 4294901760
    %432 = vmatpush1.msra.mxu0 %v431
    %433 = vmatprep.subr.mxu0 0.0
    %434 = vmatpush1.msra.mxu0 0.0
    %435 = vmatprep.subr.mxu0 0.0
    %436 = vmatpush1.msra.mxu0 0.0
    %437 = vmatprep.subr.mxu0 0.0
    %438 = vmatpush1.msra.mxu0 0.0
    %439 = vmatprep.subr.mxu0 0.0
    %440 = vmatpush1.msra.mxu0 0.0
    %441 = vmatprep.subr.mxu0 0.0
    %442 = vmatpush1.msra.mxu0 0.0
    %443 = vmatprep.subr.mxu0 0.0
    %444 = vmatpush1.msra.mxu0 0.0
    %445 = vmatprep.subr.mxu0 0.0
    %446 = vmatpush1.msra.mxu0 0.0
    %447 = vmatprep.subr.mxu0 0.0
    %448 = vmatpush1.msra.mxu0 0.0
    %449 = vmatprep.subr.mxu0 0.0
    %450 = vmatpush1.msra.mxu0 0.0
    %451 = vmatprep.subr.mxu0 0.0
    %452 = vmatpush1.msra.mxu0 0.0
    %453 = vmatprep.subr.mxu0 0.0
    %454 = vmatpush1.msra.mxu0 0.0
    %455 = vmatprep.subr.mxu0 0.0
    %456 = vmatpush1.msra.mxu0 0.0
    %457 = vmatprep.subr.mxu0 0.0
    %458 = vmatpush1.msra.mxu0 0.0
    %459 = vmatprep.subr.mxu0 0.0
    %460 = vmatpush1.msra.mxu0 0.0
    %461 = vmatprep.subr.mxu0 0.0
    %462 = vmatpush1.msra.mxu0 0.0
    %463 = vmatprep.subr.mxu0 0.0
    %464 = vmatpush1.msra.mxu0 0.0
    %465 = vmatprep.subr.mxu0 0.0
    %466 = vmatpush1.msra.mxu0 0.0
    %467 = vmatprep.subr.mxu0 0.0
    %468 = vmatpush1.msra.mxu0 0.0
    %469 = vmatprep.subr.mxu0 0.0
    %470 = vmatpush1.msra.mxu0 0.0
    %471 = vmatprep.subr.mxu0 0.0
    %472 = vmatpush1.msra.mxu0 0.0
    %473 = vmatprep.subr.mxu0 0.0
    %474 = vmatpush1.msra.mxu0 0.0
    %475 = vmatprep.subr.mxu0 0.0
    %476 = vmatpush1.msra.mxu0 0.0
    %477 = vmatprep.subr.mxu0 0.0
    %478 = vmatpush1.msra.mxu0 0.0
    %479 = vmatprep.subr.mxu0 0.0
    %480 = vmatpush1.msra.mxu0 0.0
    %481 = vmatprep.subr.mxu0 0.0
    %482 = vmatpush1.msra.mxu0 0.0
    %483 = vmatprep.subr.mxu0 0.0
    %484 = vmatpush1.msra.mxu0 0.0
    %485 = vmatprep.subr.mxu0 0.0
    %486 = vmatpush1.msra.mxu0 0.0
    %487 = vmatprep.subr.mxu0 0.0
    %488 = vmatpush1.msra.mxu0 0.0
    %489 = vmatprep.subr.mxu0 0.0
    %490 = vmatpush1.msra.mxu0 0.0
    %491 = vmatprep.mubr.f32.mxu0 0.0
    %v492 = vand.u32 %v60, 4294901760
    %493 = vmatmul.mubr.f32.gmra.mrb[0].mxu0 %v492
    %v494 = vpop.f32.mrb[0].mxu0
    %v495 = vadd.f32 %v407, %v494
    %v496 = vpop.f32.mrb[0].mxu0
    %497 = vmatprep.mubr.f32.mxu0 0.0
    %v498 = vand.u32 %v63, 4294901760
    %499 = vmatmul.mubr.f32.gmra.mrb[0].mxu0 %v498
    %v500 = vpop.f32.mrb[0].mxu0
    %v501 = vadd.f32 %v415, %v500
    %v502 = vpop.f32.mrb[0].mxu0
    %503 = vdwg.mxu0
    %504 = vmatprep.subr.mxu0 0.0
    %v505 = vand.u32 %v41, 4294901760
    %506 = vmatpush1.msra.mxu0 %v505
    %507 = vmatprep.subr.mxu0 0.0
    %v508 = vand.u32 %v42, 4294901760
    %509 = vmatpush1.msra.mxu0 %v508
    %510 = vmatprep.subr.mxu0 0.0
    %v511 = vand.u32 %v67, 4294901760
    %512 = vmatpush1.msra.mxu0 %v511
    %513 = vmatprep.subr.mxu0 0.0
    %514 = vmatpush1.msra.mxu0 0.0
    %515 = vmatprep.subr.mxu0 0.0
    %516 = vmatpush1.msra.mxu0 0.0
    %517 = vmatprep.subr.mxu0 0.0
    %518 = vmatpush1.msra.mxu0 0.0
    %519 = vmatprep.subr.mxu0 0.0
    %520 = vmatpush1.msra.mxu0 0.0
    %521 = vmatprep.subr.mxu0 0.0
    %522 = vmatpush1.msra.mxu0 0.0
    %523 = vmatprep.subr.mxu0 0.0
    %524 = vmatpush1.msra.mxu0 0.0
    %525 = vmatprep.subr.mxu0 0.0
    %526 = vmatpush1.msra.mxu0 0.0
    %527 = vmatprep.subr.mxu0 0.0
    %528 = vmatpush1.msra.mxu0 0.0
    %529 = vmatprep.subr.mxu0 0.0
    %530 = vmatpush1.msra.mxu0 0.0
    %531 = vmatprep.subr.mxu0 0.0
    %532 = vmatpush1.msra.mxu0 0.0
    %533 = vmatprep.subr.mxu0 0.0
    %534 = vmatpush1.msra.mxu0 0.0
    %535 = vmatprep.subr.mxu0 0.0
    %536 = vmatpush1.msra.mxu0 0.0
    %537 = vmatprep.subr.mxu0 0.0
    %538 = vmatpush1.msra.mxu0 0.0
    %539 = vmatprep.subr.mxu0 0.0
    %540 = vmatpush1.msra.mxu0 0.0
    %541 = vmatprep.subr.mxu0 0.0
    %542 = vmatpush1.msra.mxu0 0.0
    %543 = vmatprep.subr.mxu0 0.0
    %544 = vmatpush1.msra.mxu0 0.0
    %545 = vmatprep.subr.mxu0 0.0
    %546 = vmatpush1.msra.mxu0 0.0
    %547 = vmatprep.subr.mxu0 0.0
    %548 = vmatpush1.msra.mxu0 0.0
    %549 = vmatprep.subr.mxu0 0.0
    %550 = vmatpush1.msra.mxu0 0.0
    %551 = vmatprep.subr.mxu0 0.0
    %552 = vmatpush1.msra.mxu0 0.0
    %553 = vmatprep.subr.mxu0 0.0
    %554 = vmatpush1.msra.mxu0 0.0
    %555 = vmatprep.subr.mxu0 0.0
    %556 = vmatpush1.msra.mxu0 0.0
    %557 = vmatprep.subr.mxu0 0.0
    %558 = vmatpush1.msra.mxu0 0.0
    %559 = vmatprep.subr.mxu0 0.0
    %560 = vmatpush1.msra.mxu0 0.0
    %561 = vmatprep.subr.mxu0 0.0
    %562 = vmatpush1.msra.mxu0 0.0
    %563 = vmatprep.subr.mxu0 0.0
    %564 = vmatpush1.msra.mxu0 0.0
    %565 = vmatprep.subr.mxu0 0.0
    %566 = vmatpush1.msra.mxu0 0.0
    %567 = vmatprep.subr.mxu0 0.0
    %568 = vmatpush1.msra.mxu0 0.0
    %569 = vmatprep.subr.mxu0 0.0
    %570 = vmatpush1.msra.mxu0 0.0
    %571 = vmatprep.mubr.f32.mxu0 0.0
    %v572 = vand.u32 %v60, 4294901760
    %573 = vmatmul.mubr.f32.gmra.mrb[0].mxu0 %v572
    %v574 = vpop.f32.mrb[0].mxu0
    %v575 = vadd.f32 %v495, %v574
    %v576 = vpop.f32.mrb[0].mxu0
    %577 = vmatprep.mubr.f32.mxu0 0.0
    %v578 = vand.u32 %v63, 4294901760
    %579 = vmatmul.mubr.f32.gmra.mrb[0].mxu0 %v578
    %v580 = vpop.f32.mrb[0].mxu0
    %v581 = vadd.f32 %v501, %v580
    %v582 = vpop.f32.mrb[0].mxu0
    %583 = vdwg.mxu0
    %v584 = vmax.f32 %v575, 0.0
    %v585 = vmax.f32 %v581, 0.0
    %v586 = vld [vmem:[%s3] sm:$0xff]
    %v587 = vld [vmem:[%s3 + $0x8] sm:$0xff]
    %v588 = vld [vmem:[%s3 + $0x10] sm:$0xf]
    %v589 = vld [vmem:[%s4] sm:$0xff]
    %v590 = vld [vmem:[%s4 + $0x8] sm:$0xff]
    %v591 = vld [vmem:[%s4 + $0x10] sm:$0xf]
    %593 = vset.pattern.permute.xlu0 0
    %594 = vperm.xlu0 %593, %v589
    %v595 = vpop.permute.xlu0 %594
    %598 = vset.pattern.permute.xlu0 0
    %599 = vperm.xlu0 %598, %v590
    %v600 = vpop.permute.xlu0 %599
    %603 = vset.pattern.permute.xlu0 0
    %604 = vperm.xlu0 %603, %v591
    %v605 = vpop.permute.xlu0 %604
    %vm607 = vcmask 80896
    %v609 = vsel %vm607, %v586, 0
    %v612 = vsel %vm607, %v587, 0
    %v615 = vsel %vm607, %v588, 0
    %vm617 = vcmask 1041408
    %v619 = vsel %vm617, %v585, 0
    %621 = vmatprep.subr.mxu0 0.0
    %v622 = vand.u32 %v584, 4294901760
    %623 = vmatpush1.msra.mxu0 %v622
    %624 = vmatprep.subr.mxu0 0.0
    %v625 = vand.u32 %v619, 4294901760
    %626 = vmatpush1.msra.mxu0 %v625
    %627 = vmatprep.subr.mxu0 0.0
    %628 = vmatpush1.msra.mxu0 0.0
    %629 = vmatprep.subr.mxu0 0.0
    %630 = vmatpush1.msra.mxu0 0.0
    %631 = vmatprep.subr.mxu0 0.0
    %632 = vmatpush1.msra.mxu0 0.0
    %633 = vmatprep.subr.mxu0 0.0
    %634 = vmatpush1.msra.mxu0 0.0
    %635 = vmatprep.subr.mxu0 0.0
    %636 = vmatpush1.msra.mxu0 0.0
    %637 = vmatprep.subr.mxu0 0.0
    %638 = vmatpush1.msra.mxu0 0.0
    %639 = vmatprep.subr.mxu0 0.0
    %640 = vmatpush1.msra.mxu0 0.0
    %641 = vmatprep.subr.mxu0 0.0
    %642 = vmatpush1.msra.mxu0 0.0
    %643 = vmatprep.subr.mxu0 0.0
    %644 = vmatpush1.msra.mxu0 0.0
    %645 = vmatprep.subr.mxu0 0.0
    %646 = vmatpush1.msra.mxu0 0.0
    %647 = vmatprep.subr.mxu0 0.0
    %648 = vmatpush1.msra.mxu0 0.0
    %649 = vmatprep.subr.mxu0 0.0
    %650 = vmatpush1.msra.mxu0 0.0
    %651 = vmatprep.subr.mxu0 0.0
    %652 = vmatpush1.msra.mxu0 0.0
    %653 = vmatprep.subr.mxu0 0.0
    %654 = vmatpush1.msra.mxu0 0.0
    %655 = vmatprep.subr.mxu0 0.0
    %656 = vmatpush1.msra.mxu0 0.0
    %657 = vmatprep.subr.mxu0 0.0
    %658 = vmatpush1.msra.mxu0 0.0
    %659 = vmatprep.subr.mxu0 0.0
    %660 = vmatpush1.msra.mxu0 0.0
    %661 = vmatprep.subr.mxu0 0.0
    %662 = vmatpush1.msra.mxu0 0.0
    %663 = vmatprep.subr.mxu0 0.0
    %664 = vmatpush1.msra.mxu0 0.0
    %665 = vmatprep.subr.mxu0 0.0
    %666 = vmatpush1.msra.mxu0 0.0
    %667 = vmatprep.subr.mxu0 0.0
    %668 = vmatpush1.msra.mxu0 0.0
    %669 = vmatprep.subr.mxu0 0.0
    %670 = vmatpush1.msra.mxu0 0.0
    %671 = vmatprep.subr.mxu0 0.0
    %672 = vmatpush1.msra.mxu0 0.0
    %673 = vmatprep.subr.mxu0 0.0
    %674 = vmatpush1.msra.mxu0 0.0
    %675 = vmatprep.subr.mxu0 0.0
    %676 = vmatpush1.msra.mxu0 0.0
    %677 = vmatprep.subr.mxu0 0.0
    %678 = vmatpush1.msra.mxu0 0.0
    %679 = vmatprep.subr.mxu0 0.0
    %680 = vmatpush1.msra.mxu0 0.0
    %681 = vmatprep.subr.mxu0 0.0
    %682 = vmatpush1.msra.mxu0 0.0
    %683 = vmatprep.subr.mxu0 0.0
    %684 = vmatpush1.msra.mxu0 0.0
    %685 = vmatprep.subr.mxu0 0.0
    %686 = vmatpush1.msra.mxu0 0.0
    %687 = vmatprep.mubr.f32.mxu0 0.0
    %v688 = vand.u32 %v609, 4294901760
    %v689 = vsub.f32 %v609, %v688
    %v690 = vand.u32 %v689, 4294901760
    %v691 = vsub.f32 %v689, %v690
    %v692 = vand.u32 %v691, 4294901760
    %693 = vmatmul.mubr.f32.gmra.mrb[0].mxu0 %v692
    %v694 = vpop.f32.mrb[0].mxu0
    %v695 = vadd.f32 %v595, %v694
    %v696 = vpop.f32.mrb[0].mxu0
    %697 = vmatprep.mubr.f32.mxu0 0.0
    %v698 = vand.u32 %v612, 4294901760
    %v699 = vsub.f32 %v612, %v698
    %v700 = vand.u32 %v699, 4294901760
    %v701 = vsub.f32 %v699, %v700
    %v702 = vand.u32 %v701, 4294901760
    %703 = vmatmul.mubr.f32.gmra.mrb[0].mxu0 %v702
    %v704 = vpop.f32.mrb[0].mxu0
    %v705 = vadd.f32 %v600, %v704
    %v706 = vpop.f32.mrb[0].mxu0
    %707 = vmatprep.mubr.f32.mxu0 0.0
    %v708 = vand.u32 %v615, 4294901760
    %v709 = vsub.f32 %v615, %v708
    %v710 = vand.u32 %v709, 4294901760
    %v711 = vsub.f32 %v709, %v710
    %v712 = vand.u32 %v711, 4294901760
    %713 = vmatmul.mubr.f32.gmra.mrb[0].mxu0 %v712
    %v714 = vpop.f32.mrb[0].mxu0
    %v715 = vadd.f32 %v605, %v714
    %v716 = vpop.f32.mrb[0].mxu0
    %717 = vdwg.mxu0
    %718 = vmatprep.subr.mxu0 0.0
    %v719 = vand.u32 %v584, 4294901760
    %v720 = vsub.f32 %v584, %v719
    %v721 = vand.u32 %v720, 4294901760
    %v722 = vsub.f32 %v720, %v721
    %v723 = vand.u32 %v722, 4294901760
    %724 = vmatpush1.msra.mxu0 %v723
    %725 = vmatprep.subr.mxu0 0.0
    %v726 = vand.u32 %v619, 4294901760
    %v727 = vsub.f32 %v619, %v726
    %v728 = vand.u32 %v727, 4294901760
    %v729 = vsub.f32 %v727, %v728
    %v730 = vand.u32 %v729, 4294901760
    %731 = vmatpush1.msra.mxu0 %v730
    %732 = vmatprep.subr.mxu0 0.0
    %733 = vmatpush1.msra.mxu0 0.0
    %734 = vmatprep.subr.mxu0 0.0
    %735 = vmatpush1.msra.mxu0 0.0
    %736 = vmatprep.subr.mxu0 0.0
    %737 = vmatpush1.msra.mxu0 0.0
    %738 = vmatprep.subr.mxu0 0.0
    %739 = vmatpush1.msra.mxu0 0.0
    %740 = vmatprep.subr.mxu0 0.0
    %741 = vmatpush1.msra.mxu0 0.0
    %742 = vmatprep.subr.mxu0 0.0
    %743 = vmatpush1.msra.mxu0 0.0
    %744 = vmatprep.subr.mxu0 0.0
    %745 = vmatpush1.msra.mxu0 0.0
    %746 = vmatprep.subr.mxu0 0.0
    %747 = vmatpush1.msra.mxu0 0.0
    %748 = vmatprep.subr.mxu0 0.0
    %749 = vmatpush1.msra.mxu0 0.0
    %750 = vmatprep.subr.mxu0 0.0
    %751 = vmatpush1.msra.mxu0 0.0
    %752 = vmatprep.subr.mxu0 0.0
    %753 = vmatpush1.msra.mxu0 0.0
    %754 = vmatprep.subr.mxu0 0.0
    %755 = vmatpush1.msra.mxu0 0.0
    %756 = vmatprep.subr.mxu0 0.0
    %757 = vmatpush1.msra.mxu0 0.0
    %758 = vmatprep.subr.mxu0 0.0
    %759 = vmatpush1.msra.mxu0 0.0
    %760 = vmatprep.subr.mxu0 0.0
    %761 = vmatpush1.msra.mxu0 0.0
    %762 = vmatprep.subr.mxu0 0.0
    %763 = vmatpush1.msra.mxu0 0.0
    %764 = vmatprep.subr.mxu0 0.0
    %765 = vmatpush1.msra.mxu0 0.0
    %766 = vmatprep.subr.mxu0 0.0
    %767 = vmatpush1.msra.mxu0 0.0
    %768 = vmatprep.subr.mxu0 0.0
    %769 = vmatpush1.msra.mxu0 0.0
    %770 = vmatprep.subr.mxu0 0.0
    %771 = vmatpush1.msra.mxu0 0.0
    %772 = vmatprep.subr.mxu0 0.0
    %773 = vmatpush1.msra.mxu0 0.0
    %774 = vmatprep.subr.mxu0 0.0
    %775 = vmatpush1.msra.mxu0 0.0
    %776 = vmatprep.subr.mxu0 0.0
    %777 = vmatpush1.msra.mxu0 0.0
    %778 = vmatprep.subr.mxu0 0.0
    %779 = vmatpush1.msra.mxu0 0.0
    %780 = vmatprep.subr.mxu0 0.0
    %781 = vmatpush1.msra.mxu0 0.0
    %782 = vmatprep.subr.mxu0 0.0
    %783 = vmatpush1.msra.mxu0 0.0
    %784 = vmatprep.subr.mxu0 0.0
    %785 = vmatpush1.msra.mxu0 0.0
    %786 = vmatprep.subr.mxu0 0.0
    %787 = vmatpush1.msra.mxu0 0.0
    %788 = vmatprep.subr.mxu0 0.0
    %789 = vmatpush1.msra.mxu0 0.0
    %790 = vmatprep.subr.mxu0 0.0
    %791 = vmatpush1.msra.mxu0 0.0
    %792 = vmatprep.mubr.f32.mxu0 0.0
    %v793 = vand.u32 %v609, 4294901760
    %794 = vmatmul.mubr.f32.gmra.mrb[0].mxu0 %v793
    %v795 = vpop.f32.mrb[0].mxu0
    %v796 = vadd.f32 %v695, %v795
    %v797 = vpop.f32.mrb[0].mxu0
    %798 = vmatprep.mubr.f32.mxu0 0.0
    %v799 = vand.u32 %v612, 4294901760
    %800 = vmatmul.mubr.f32.gmra.mrb[0].mxu0 %v799
    %v801 = vpop.f32.mrb[0].mxu0
    %v802 = vadd.f32 %v705, %v801
    %v803 = vpop.f32.mrb[0].mxu0
    %804 = vmatprep.mubr.f32.mxu0 0.0
    %v805 = vand.u32 %v615, 4294901760
    %806 = vmatmul.mubr.f32.gmra.mrb[0].mxu0 %v805
    %v807 = vpop.f32.mrb[0].mxu0
    %v808 = vadd.f32 %v715, %v807
    %v809 = vpop.f32.mrb[0].mxu0
    %810 = vdwg.mxu0
    %811 = vmatprep.subr.mxu0 0.0
    %v812 = vand.u32 %v584, 4294901760
    %v813 = vsub.f32 %v584, %v812
    %814 = vmatpush1.msra.mxu0 %v813
    %815 = vmatprep.subr.mxu0 0.0
    %v816 = vand.u32 %v619, 4294901760
    %v817 = vsub.f32 %v619, %v816
    %818 = vmatpush1.msra.mxu0 %v817
    %819 = vmatprep.subr.mxu0 0.0
    %820 = vmatpush1.msra.mxu0 0.0
    %821 = vmatprep.subr.mxu0 0.0
    %822 = vmatpush1.msra.mxu0 0.0
    %823 = vmatprep.subr.mxu0 0.0
    %824 = vmatpush1.msra.mxu0 0.0
    %825 = vmatprep.subr.mxu0 0.0
    %826 = vmatpush1.msra.mxu0 0.0
    %827 = vmatprep.subr.mxu0 0.0
    %828 = vmatpush1.msra.mxu0 0.0
    %829 = vmatprep.subr.mxu0 0.0
    %830 = vmatpush1.msra.mxu0 0.0
    %831 = vmatprep.subr.mxu0 0.0
    %832 = vmatpush1.msra.mxu0 0.0
    %833 = vmatprep.subr.mxu0 0.0
    %834 = vmatpush1.msra.mxu0 0.0
    %835 = vmatprep.subr.mxu0 0.0
    %836 = vmatpush1.msra.mxu0 0.0
    %837 = vmatprep.subr.mxu0 0.0
    %838 = vmatpush1.msra.mxu0 0.0
    %839 = vmatprep.subr.mxu0 0.0
    %840 = vmatpush1.msra.mxu0 0.0
    %841 = vmatprep.subr.mxu0 0.0
    %842 = vmatpush1.msra.mxu0 0.0
    %843 = vmatprep.subr.mxu0 0.0
    %844 = vmatpush1.msra.mxu0 0.0
    %845 = vmatprep.subr.mxu0 0.0
    %846 = vmatpush1.msra.mxu0 0.0
    %847 = vmatprep.subr.mxu0 0.0
    %848 = vmatpush1.msra.mxu0 0.0
    %849 = vmatprep.subr.mxu0 0.0
    %850 = vmatpush1.msra.mxu0 0.0
    %851 = vmatprep.subr.mxu0 0.0
    %852 = vmatpush1.msra.mxu0 0.0
    %853 = vmatprep.subr.mxu0 0.0
    %854 = vmatpush1.msra.mxu0 0.0
    %855 = vmatprep.subr.mxu0 0.0
    %856 = vmatpush1.msra.mxu0 0.0
    %857 = vmatprep.subr.mxu0 0.0
    %858 = vmatpush1.msra.mxu0 0.0
    %859 = vmatprep.subr.mxu0 0.0
    %860 = vmatpush1.msra.mxu0 0.0
    %861 = vmatprep.subr.mxu0 0.0
    %862 = vmatpush1.msra.mxu0 0.0
    %863 = vmatprep.subr.mxu0 0.0
    %864 = vmatpush1.msra.mxu0 0.0
    %865 = vmatprep.subr.mxu0 0.0
    %866 = vmatpush1.msra.mxu0 0.0
    %867 = vmatprep.subr.mxu0 0.0
    %868 = vmatpush1.msra.mxu0 0.0
    %869 = vmatprep.subr.mxu0 0.0
    %870 = vmatpush1.msra.mxu0 0.0
    %871 = vmatprep.subr.mxu0 0.0
    %872 = vmatpush1.msra.mxu0 0.0
    %873 = vmatprep.subr.mxu0 0.0
    %874 = vmatpush1.msra.mxu0 0.0
    %875 = vmatprep.subr.mxu0 0.0
    %876 = vmatpush1.msra.mxu0 0.0
    %877 = vmatprep.subr.mxu0 0.0
    %878 = vmatpush1.msra.mxu0 0.0
    %879 = vmatprep.mubr.f32.mxu0 0.0
    %v880 = vand.u32 %v609, 4294901760
    %v881 = vsub.f32 %v609, %v880
    %882 = vmatmul.mubr.f32.gmra.mrb[0].mxu0 %v881
    %v883 = vpop.f32.mrb[0].mxu0
    %v884 = vadd.f32 %v796, %v883
    %v885 = vpop.f32.mrb[0].mxu0
    %886 = vmatprep.mubr.f32.mxu0 0.0
    %v887 = vand.u32 %v612, 4294901760
    %v888 = vsub.f32 %v612, %v887
    %889 = vmatmul.mubr.f32.gmra.mrb[0].mxu0 %v888
    %v890 = vpop.f32.mrb[0].mxu0
    %v891 = vadd.f32 %v802, %v890
    %v892 = vpop.f32.mrb[0].mxu0
    %893 = vmatprep.mubr.f32.mxu0 0.0
    %v894 = vand.u32 %v615, 4294901760
    %v895 = vsub.f32 %v615, %v894
    %896 = vmatmul.mubr.f32.gmra.mrb[0].mxu0 %v895
    %v897 = vpop.f32.mrb[0].mxu0
    %v898 = vadd.f32 %v808, %v897
    %v899 = vpop.f32.mrb[0].mxu0
    %900 = vdwg.mxu0
    %901 = vmatprep.subr.mxu0 0.0
    %v902 = vand.u32 %v584, 4294901760
    %903 = vmatpush1.msra.mxu0 %v902
    %904 = vmatprep.subr.mxu0 0.0
    %v905 = vand.u32 %v619, 4294901760
    %906 = vmatpush1.msra.mxu0 %v905
    %907 = vmatprep.subr.mxu0 0.0
    %908 = vmatpush1.msra.mxu0 0.0
    %909 = vmatprep.subr.mxu0 0.0
    %910 = vmatpush1.msra.mxu0 0.0
    %911 = vmatprep.subr.mxu0 0.0
    %912 = vmatpush1.msra.mxu0 0.0
    %913 = vmatprep.subr.mxu0 0.0
    %914 = vmatpush1.msra.mxu0 0.0
    %915 = vmatprep.subr.mxu0 0.0
    %916 = vmatpush1.msra.mxu0 0.0
    %917 = vmatprep.subr.mxu0 0.0
    %918 = vmatpush1.msra.mxu0 0.0
    %919 = vmatprep.subr.mxu0 0.0
    %920 = vmatpush1.msra.mxu0 0.0
    %921 = vmatprep.subr.mxu0 0.0
    %922 = vmatpush1.msra.mxu0 0.0
    %923 = vmatprep.subr.mxu0 0.0
    %924 = vmatpush1.msra.mxu0 0.0
    %925 = vmatprep.subr.mxu0 0.0
    %926 = vmatpush1.msra.mxu0 0.0
    %927 = vmatprep.subr.mxu0 0.0
    %928 = vmatpush1.msra.mxu0 0.0
    %929 = vmatprep.subr.mxu0 0.0
    %930 = vmatpush1.msra.mxu0 0.0
    %931 = vmatprep.subr.mxu0 0.0
    %932 = vmatpush1.msra.mxu0 0.0
    %933 = vmatprep.subr.mxu0 0.0
    %934 = vmatpush1.msra.mxu0 0.0
    %935 = vmatprep.subr.mxu0 0.0
    %936 = vmatpush1.msra.mxu0 0.0
    %937 = vmatprep.subr.mxu0 0.0
    %938 = vmatpush1.msra.mxu0 0.0
    %939 = vmatprep.subr.mxu0 0.0
    %940 = vmatpush1.msra.mxu0 0.0
    %941 = vmatprep.subr.mxu0 0.0
    %942 = vmatpush1.msra.mxu0 0.0
    %943 = vmatprep.subr.mxu0 0.0
    %944 = vmatpush1.msra.mxu0 0.0
    %945 = vmatprep.subr.mxu0 0.0
    %946 = vmatpush1.msra.mxu0 0.0
    %947 = vmatprep.subr.mxu0 0.0
    %948 = vmatpush1.msra.mxu0 0.0
    %949 = vmatprep.subr.mxu0 0.0
    %950 = vmatpush1.msra.mxu0 0.0
    %951 = vmatprep.subr.mxu0 0.0
    %952 = vmatpush1.msra.mxu0 0.0
    %953 = vmatprep.subr.mxu0 0.0
    %954 = vmatpush1.msra.mxu0 0.0
    %955 = vmatprep.subr.mxu0 0.0
    %956 = vmatpush1.msra.mxu0 0.0
    %957 = vmatprep.subr.mxu0 0.0
    %958 = vmatpush1.msra.mxu0 0.0
    %959 = vmatprep.subr.mxu0 0.0
    %960 = vmatpush1.msra.mxu0 0.0
    %961 = vmatprep.subr.mxu0 0.0
    %962 = vmatpush1.msra.mxu0 0.0
    %963 = vmatprep.subr.mxu0 0.0
    %964 = vmatpush1.msra.mxu0 0.0
    %965 = vmatprep.subr.mxu0 0.0
    %966 = vmatpush1.msra.mxu0 0.0
    %967 = vmatprep.mubr.f32.mxu0 0.0
    %v968 = vand.u32 %v609, 4294901760
    %v969 = vsub.f32 %v609, %v968
    %v970 = vand.u32 %v969, 4294901760
    %971 = vmatmul.mubr.f32.gmra.mrb[0].mxu0 %v970
    %v972 = vpop.f32.mrb[0].mxu0
    %v973 = vadd.f32 %v884, %v972
    %v974 = vpop.f32.mrb[0].mxu0
    %975 = vmatprep.mubr.f32.mxu0 0.0
    %v976 = vand.u32 %v612, 4294901760
    %v977 = vsub.f32 %v612, %v976
    %v978 = vand.u32 %v977, 4294901760
    %979 = vmatmul.mubr.f32.gmra.mrb[0].mxu0 %v978
    %v980 = vpop.f32.mrb[0].mxu0
    %v981 = vadd.f32 %v891, %v980
    %v982 = vpop.f32.mrb[0].mxu0
    %983 = vmatprep.mubr.f32.mxu0 0.0
    %v984 = vand.u32 %v615, 4294901760
    %v985 = vsub.f32 %v615, %v984
    %v986 = vand.u32 %v985, 4294901760
    %987 = vmatmul.mubr.f32.gmra.mrb[0].mxu0 %v986
    %v988 = vpop.f32.mrb[0].mxu0
    %v989 = vadd.f32 %v898, %v988
    %v990 = vpop.f32.mrb[0].mxu0
    %991 = vdwg.mxu0
    %992 = vmatprep.subr.mxu0 0.0
    %v993 = vand.u32 %v584, 4294901760
    %v994 = vsub.f32 %v584, %v993
    %v995 = vand.u32 %v994, 4294901760
    %996 = vmatpush1.msra.mxu0 %v995
    %997 = vmatprep.subr.mxu0 0.0
    %v998 = vand.u32 %v619, 4294901760
    %v999 = vsub.f32 %v619, %v998
    %v1000 = vand.u32 %v999, 4294901760
    %1001 = vmatpush1.msra.mxu0 %v1000
    %1002 = vmatprep.subr.mxu0 0.0
    %1003 = vmatpush1.msra.mxu0 0.0
    %1004 = vmatprep.subr.mxu0 0.0
    %1005 = vmatpush1.msra.mxu0 0.0
    %1006 = vmatprep.subr.mxu0 0.0
    %1007 = vmatpush1.msra.mxu0 0.0
    %1008 = vmatprep.subr.mxu0 0.0
    %1009 = vmatpush1.msra.mxu0 0.0
    %1010 = vmatprep.subr.mxu0 0.0
    %1011 = vmatpush1.msra.mxu0 0.0
    %1012 = vmatprep.subr.mxu0 0.0
    %1013 = vmatpush1.msra.mxu0 0.0
    %1014 = vmatprep.subr.mxu0 0.0
    %1015 = vmatpush1.msra.mxu0 0.0
    %1016 = vmatprep.subr.mxu0 0.0
    %1017 = vmatpush1.msra.mxu0 0.0
    %1018 = vmatprep.subr.mxu0 0.0
    %1019 = vmatpush1.msra.mxu0 0.0
    %1020 = vmatprep.subr.mxu0 0.0
    %1021 = vmatpush1.msra.mxu0 0.0
    %1022 = vmatprep.subr.mxu0 0.0
    %1023 = vmatpush1.msra.mxu0 0.0
    %1024 = vmatprep.subr.mxu0 0.0
    %1025 = vmatpush1.msra.mxu0 0.0
    %1026 = vmatprep.subr.mxu0 0.0
    %1027 = vmatpush1.msra.mxu0 0.0
    %1028 = vmatprep.subr.mxu0 0.0
    %1029 = vmatpush1.msra.mxu0 0.0
    %1030 = vmatprep.subr.mxu0 0.0
    %1031 = vmatpush1.msra.mxu0 0.0
    %1032 = vmatprep.subr.mxu0 0.0
    %1033 = vmatpush1.msra.mxu0 0.0
    %1034 = vmatprep.subr.mxu0 0.0
    %1035 = vmatpush1.msra.mxu0 0.0
    %1036 = vmatprep.subr.mxu0 0.0
    %1037 = vmatpush1.msra.mxu0 0.0
    %1038 = vmatprep.subr.mxu0 0.0
    %1039 = vmatpush1.msra.mxu0 0.0
    %1040 = vmatprep.subr.mxu0 0.0
    %1041 = vmatpush1.msra.mxu0 0.0
    %1042 = vmatprep.subr.mxu0 0.0
    %1043 = vmatpush1.msra.mxu0 0.0
    %1044 = vmatprep.subr.mxu0 0.0
    %1045 = vmatpush1.msra.mxu0 0.0
    %1046 = vmatprep.subr.mxu0 0.0
    %1047 = vmatpush1.msra.mxu0 0.0
    %1048 = vmatprep.subr.mxu0 0.0
    %1049 = vmatpush1.msra.mxu0 0.0
    %1050 = vmatprep.subr.mxu0 0.0
    %1051 = vmatpush1.msra.mxu0 0.0
    %1052 = vmatprep.subr.mxu0 0.0
    %1053 = vmatpush1.msra.mxu0 0.0
    %1054 = vmatprep.subr.mxu0 0.0
    %1055 = vmatpush1.msra.mxu0 0.0
    %1056 = vmatprep.subr.mxu0 0.0
    %1057 = vmatpush1.msra.mxu0 0.0
    %1058 = vmatprep.subr.mxu0 0.0
    %1059 = vmatpush1.msra.mxu0 0.0
    %1060 = vmatprep.subr.mxu0 0.0
    %1061 = vmatpush1.msra.mxu0 0.0
    %1062 = vmatprep.mubr.f32.mxu0 0.0
    %v1063 = vand.u32 %v609, 4294901760
    %1064 = vmatmul.mubr.f32.gmra.mrb[0].mxu0 %v1063
    %v1065 = vpop.f32.mrb[0].mxu0
    %v1066 = vadd.f32 %v973, %v1065
    %v1067 = vpop.f32.mrb[0].mxu0
    %1068 = vmatprep.mubr.f32.mxu0 0.0
    %v1069 = vand.u32 %v612, 4294901760
    %1070 = vmatmul.mubr.f32.gmra.mrb[0].mxu0 %v1069
    %v1071 = vpop.f32.mrb[0].mxu0
    %v1072 = vadd.f32 %v981, %v1071
    %v1073 = vpop.f32.mrb[0].mxu0
    %1074 = vmatprep.mubr.f32.mxu0 0.0
    %v1075 = vand.u32 %v615, 4294901760
    %1076 = vmatmul.mubr.f32.gmra.mrb[0].mxu0 %v1075
    %v1077 = vpop.f32.mrb[0].mxu0
    %v1078 = vadd.f32 %v989, %v1077
    %v1079 = vpop.f32.mrb[0].mxu0
    %1080 = vdwg.mxu0
    %1081 = vmatprep.subr.mxu0 0.0
    %v1082 = vand.u32 %v584, 4294901760
    %1083 = vmatpush1.msra.mxu0 %v1082
    %1084 = vmatprep.subr.mxu0 0.0
    %v1085 = vand.u32 %v619, 4294901760
    %1086 = vmatpush1.msra.mxu0 %v1085
    %1087 = vmatprep.subr.mxu0 0.0
    %1088 = vmatpush1.msra.mxu0 0.0
    %1089 = vmatprep.subr.mxu0 0.0
    %1090 = vmatpush1.msra.mxu0 0.0
    %1091 = vmatprep.subr.mxu0 0.0
    %1092 = vmatpush1.msra.mxu0 0.0
    %1093 = vmatprep.subr.mxu0 0.0
    %1094 = vmatpush1.msra.mxu0 0.0
    %1095 = vmatprep.subr.mxu0 0.0
    %1096 = vmatpush1.msra.mxu0 0.0
    %1097 = vmatprep.subr.mxu0 0.0
    %1098 = vmatpush1.msra.mxu0 0.0
    %1099 = vmatprep.subr.mxu0 0.0
    %1100 = vmatpush1.msra.mxu0 0.0
    %1101 = vmatprep.subr.mxu0 0.0
    %1102 = vmatpush1.msra.mxu0 0.0
    %1103 = vmatprep.subr.mxu0 0.0
    %1104 = vmatpush1.msra.mxu0 0.0
    %1105 = vmatprep.subr.mxu0 0.0
    %1106 = vmatpush1.msra.mxu0 0.0
    %1107 = vmatprep.subr.mxu0 0.0
    %1108 = vmatpush1.msra.mxu0 0.0
    %1109 = vmatprep.subr.mxu0 0.0
    %1110 = vmatpush1.msra.mxu0 0.0
    %1111 = vmatprep.subr.mxu0 0.0
    %1112 = vmatpush1.msra.mxu0 0.0
    %1113 = vmatprep.subr.mxu0 0.0
    %1114 = vmatpush1.msra.mxu0 0.0
    %1115 = vmatprep.subr.mxu0 0.0
    %1116 = vmatpush1.msra.mxu0 0.0
    %1117 = vmatprep.subr.mxu0 0.0
    %1118 = vmatpush1.msra.mxu0 0.0
    %1119 = vmatprep.subr.mxu0 0.0
    %1120 = vmatpush1.msra.mxu0 0.0
    %1121 = vmatprep.subr.mxu0 0.0
    %1122 = vmatpush1.msra.mxu0 0.0
    %1123 = vmatprep.subr.mxu0 0.0
    %1124 = vmatpush1.msra.mxu0 0.0
    %1125 = vmatprep.subr.mxu0 0.0
    %1126 = vmatpush1.msra.mxu0 0.0
    %1127 = vmatprep.subr.mxu0 0.0
    %1128 = vmatpush1.msra.mxu0 0.0
    %1129 = vmatprep.subr.mxu0 0.0
    %1130 = vmatpush1.msra.mxu0 0.0
    %1131 = vmatprep.subr.mxu0 0.0
    %1132 = vmatpush1.msra.mxu0 0.0
    %1133 = vmatprep.subr.mxu0 0.0
    %1134 = vmatpush1.msra.mxu0 0.0
    %1135 = vmatprep.subr.mxu0 0.0
    %1136 = vmatpush1.msra.mxu0 0.0
    %1137 = vmatprep.subr.mxu0 0.0
    %1138 = vmatpush1.msra.mxu0 0.0
    %1139 = vmatprep.subr.mxu0 0.0
    %1140 = vmatpush1.msra.mxu0 0.0
    %1141 = vmatprep.subr.mxu0 0.0
    %1142 = vmatpush1.msra.mxu0 0.0
    %1143 = vmatprep.subr.mxu0 0.0
    %1144 = vmatpush1.msra.mxu0 0.0
    %1145 = vmatprep.subr.mxu0 0.0
    %1146 = vmatpush1.msra.mxu0 0.0
    %1147 = vmatprep.mubr.f32.mxu0 0.0
    %v1148 = vand.u32 %v609, 4294901760
    %1149 = vmatmul.mubr.f32.gmra.mrb[0].mxu0 %v1148
    %v1150 = vpop.f32.mrb[0].mxu0
    %v1151 = vadd.f32 %v1066, %v1150
    %v1152 = vpop.f32.mrb[0].mxu0
    %1153 = vmatprep.mubr.f32.mxu0 0.0
    %v1154 = vand.u32 %v612, 4294901760
    %1155 = vmatmul.mubr.f32.gmra.mrb[0].mxu0 %v1154
    %v1156 = vpop.f32.mrb[0].mxu0
    %v1157 = vadd.f32 %v1072, %v1156
    %v1158 = vpop.f32.mrb[0].mxu0
    %1159 = vmatprep.mubr.f32.mxu0 0.0
    %v1160 = vand.u32 %v615, 4294901760
    %1161 = vmatmul.mubr.f32.gmra.mrb[0].mxu0 %v1160
    %v1162 = vpop.f32.mrb[0].mxu0
    %v1163 = vadd.f32 %v1078, %v1162
    %v1164 = vpop.f32.mrb[0].mxu0
    %1165 = vdwg.mxu0
    %v1166 = vmax.f32 %v1151, 0.0
    %v1167 = vmax.f32 %v1157, 0.0
    %v1168 = vmax.f32 %v1163, 0.0
    %v1169 = vld [vmem:[%s5] sm:$0xff]
    %v1170 = vld [vmem:[%s5 + $0x8] sm:$0x3]
    %v1171 = vld [vmem:[%s6] sm:$0xff]
    %v1172 = vld [vmem:[%s6 + $0x8] sm:$0x3]
    %1174 = vset.pattern.permute.xlu0 0
    %1175 = vperm.xlu0 %1174, %v1171
    %v1176 = vpop.permute.xlu0 %1175
    %1179 = vset.pattern.permute.xlu0 0
    %1180 = vperm.xlu0 %1179, %v1172
    %v1181 = vpop.permute.xlu0 %1180
    %vm1183 = vcmask 162816
    %v1185 = vsel %vm1183, %v1169, 0
    %v1188 = vsel %vm1183, %v1170, 0
    %vm1190 = vcmask 1043456
    %v1192 = vsel %vm1190, %v1168, 0
    %1194 = vmatprep.subr.mxu0 0.0
    %v1195 = vand.u32 %v1166, 4294901760
    %1196 = vmatpush1.msra.mxu0 %v1195
    %1197 = vmatprep.subr.mxu0 0.0
    %v1198 = vand.u32 %v1167, 4294901760
    %1199 = vmatpush1.msra.mxu0 %v1198
    %1200 = vmatprep.subr.mxu0 0.0
    %v1201 = vand.u32 %v1192, 4294901760
    %1202 = vmatpush1.msra.mxu0 %v1201
    %1203 = vmatprep.subr.mxu0 0.0
    %1204 = vmatpush1.msra.mxu0 0.0
    %1205 = vmatprep.subr.mxu0 0.0
    %1206 = vmatpush1.msra.mxu0 0.0
    %1207 = vmatprep.subr.mxu0 0.0
    %1208 = vmatpush1.msra.mxu0 0.0
    %1209 = vmatprep.subr.mxu0 0.0
    %1210 = vmatpush1.msra.mxu0 0.0
    %1211 = vmatprep.subr.mxu0 0.0
    %1212 = vmatpush1.msra.mxu0 0.0
    %1213 = vmatprep.subr.mxu0 0.0
    %1214 = vmatpush1.msra.mxu0 0.0
    %1215 = vmatprep.subr.mxu0 0.0
    %1216 = vmatpush1.msra.mxu0 0.0
    %1217 = vmatprep.subr.mxu0 0.0
    %1218 = vmatpush1.msra.mxu0 0.0
    %1219 = vmatprep.subr.mxu0 0.0
    %1220 = vmatpush1.msra.mxu0 0.0
    %1221 = vmatprep.subr.mxu0 0.0
    %1222 = vmatpush1.msra.mxu0 0.0
    %1223 = vmatprep.subr.mxu0 0.0
    %1224 = vmatpush1.msra.mxu0 0.0
    %1225 = vmatprep.subr.mxu0 0.0
    %1226 = vmatpush1.msra.mxu0 0.0
    %1227 = vmatprep.subr.mxu0 0.0
    %1228 = vmatpush1.msra.mxu0 0.0
    %1229 = vmatprep.subr.mxu0 0.0
    %1230 = vmatpush1.msra.mxu0 0.0
    %1231 = vmatprep.subr.mxu0 0.0
    %1232 = vmatpush1.msra.mxu0 0.0
    %1233 = vmatprep.subr.mxu0 0.0
    %1234 = vmatpush1.msra.mxu0 0.0
    %1235 = vmatprep.subr.mxu0 0.0
    %1236 = vmatpush1.msra.mxu0 0.0
    %1237 = vmatprep.subr.mxu0 0.0
    %1238 = vmatpush1.msra.mxu0 0.0
    %1239 = vmatprep.subr.mxu0 0.0
    %1240 = vmatpush1.msra.mxu0 0.0
    %1241 = vmatprep.subr.mxu0 0.0
    %1242 = vmatpush1.msra.mxu0 0.0
    %1243 = vmatprep.subr.mxu0 0.0
    %1244 = vmatpush1.msra.mxu0 0.0
    %1245 = vmatprep.subr.mxu0 0.0
    %1246 = vmatpush1.msra.mxu0 0.0
    %1247 = vmatprep.subr.mxu0 0.0
    %1248 = vmatpush1.msra.mxu0 0.0
    %1249 = vmatprep.subr.mxu0 0.0
    %1250 = vmatpush1.msra.mxu0 0.0
    %1251 = vmatprep.subr.mxu0 0.0
    %1252 = vmatpush1.msra.mxu0 0.0
    %1253 = vmatprep.subr.mxu0 0.0
    %1254 = vmatpush1.msra.mxu0 0.0
    %1255 = vmatprep.subr.mxu0 0.0
    %1256 = vmatpush1.msra.mxu0 0.0
    %1257 = vmatprep.subr.mxu0 0.0
    %1258 = vmatpush1.msra.mxu0 0.0
    %1259 = vmatprep.subr.mxu0 0.0
    %1260 = vmatpush1.msra.mxu0 0.0
    %1261 = vmatprep.mubr.f32.mxu0 0.0
    %v1262 = vand.u32 %v1185, 4294901760
    %v1263 = vsub.f32 %v1185, %v1262
    %v1264 = vand.u32 %v1263, 4294901760
    %v1265 = vsub.f32 %v1263, %v1264
    %v1266 = vand.u32 %v1265, 4294901760
    %1267 = vmatmul.mubr.f32.gmra.mrb[0].mxu0 %v1266
    %v1268 = vpop.f32.mrb[0].mxu0
    %v1269 = vadd.f32 %v1176, %v1268
    %v1270 = vpop.f32.mrb[0].mxu0
    %1271 = vmatprep.mubr.f32.mxu0 0.0
    %v1272 = vand.u32 %v1188, 4294901760
    %v1273 = vsub.f32 %v1188, %v1272
    %v1274 = vand.u32 %v1273, 4294901760
    %v1275 = vsub.f32 %v1273, %v1274
    %v1276 = vand.u32 %v1275, 4294901760
    %1277 = vmatmul.mubr.f32.gmra.mrb[0].mxu0 %v1276
    %v1278 = vpop.f32.mrb[0].mxu0
    %v1279 = vadd.f32 %v1181, %v1278
    %v1280 = vpop.f32.mrb[0].mxu0
    %1281 = vdwg.mxu0
    %1282 = vmatprep.subr.mxu0 0.0
    %v1283 = vand.u32 %v1166, 4294901760
    %v1284 = vsub.f32 %v1166, %v1283
    %v1285 = vand.u32 %v1284, 4294901760
    %v1286 = vsub.f32 %v1284, %v1285
    %v1287 = vand.u32 %v1286, 4294901760
    %1288 = vmatpush1.msra.mxu0 %v1287
    %1289 = vmatprep.subr.mxu0 0.0
    %v1290 = vand.u32 %v1167, 4294901760
    %v1291 = vsub.f32 %v1167, %v1290
    %v1292 = vand.u32 %v1291, 4294901760
    %v1293 = vsub.f32 %v1291, %v1292
    %v1294 = vand.u32 %v1293, 4294901760
    %1295 = vmatpush1.msra.mxu0 %v1294
    %1296 = vmatprep.subr.mxu0 0.0
    %v1297 = vand.u32 %v1192, 4294901760
    %v1298 = vsub.f32 %v1192, %v1297
    %v1299 = vand.u32 %v1298, 4294901760
    %v1300 = vsub.f32 %v1298, %v1299
    %v1301 = vand.u32 %v1300, 4294901760
    %1302 = vmatpush1.msra.mxu0 %v1301
    %1303 = vmatprep.subr.mxu0 0.0
    %1304 = vmatpush1.msra.mxu0 0.0
    %1305 = vmatprep.subr.mxu0 0.0
    %1306 = vmatpush1.msra.mxu0 0.0
    %1307 = vmatprep.subr.mxu0 0.0
    %1308 = vmatpush1.msra.mxu0 0.0
    %1309 = vmatprep.subr.mxu0 0.0
    %1310 = vmatpush1.msra.mxu0 0.0
    %1311 = vmatprep.subr.mxu0 0.0
    %1312 = vmatpush1.msra.mxu0 0.0
    %1313 = vmatprep.subr.mxu0 0.0
    %1314 = vmatpush1.msra.mxu0 0.0
    %1315 = vmatprep.subr.mxu0 0.0
    %1316 = vmatpush1.msra.mxu0 0.0
    %1317 = vmatprep.subr.mxu0 0.0
    %1318 = vmatpush1.msra.mxu0 0.0
    %1319 = vmatprep.subr.mxu0 0.0
    %1320 = vmatpush1.msra.mxu0 0.0
    %1321 = vmatprep.subr.mxu0 0.0
    %1322 = vmatpush1.msra.mxu0 0.0
    %1323 = vmatprep.subr.mxu0 0.0
    %1324 = vmatpush1.msra.mxu0 0.0
    %1325 = vmatprep.subr.mxu0 0.0
    %1326 = vmatpush1.msra.mxu0 0.0
    %1327 = vmatprep.subr.mxu0 0.0
    %1328 = vmatpush1.msra.mxu0 0.0
    %1329 = vmatprep.subr.mxu0 0.0
    %1330 = vmatpush1.msra.mxu0 0.0
    %1331 = vmatprep.subr.mxu0 0.0
    %1332 = vmatpush1.msra.mxu0 0.0
    %1333 = vmatprep.subr.mxu0 0.0
    %1334 = vmatpush1.msra.mxu0 0.0
    %1335 = vmatprep.subr.mxu0 0.0
    %1336 = vmatpush1.msra.mxu0 0.0
    %1337 = vmatprep.subr.mxu0 0.0
    %1338 = vmatpush1.msra.mxu0 0.0
    %1339 = vmatprep.subr.mxu0 0.0
    %1340 = vmatpush1.msra.mxu0 0.0
    %1341 = vmatprep.subr.mxu0 0.0
    %1342 = vmatpush1.msra.mxu0 0.0
    %1343 = vmatprep.subr.mxu0 0.0
    %1344 = vmatpush1.msra.mxu0 0.0
    %1345 = vmatprep.subr.mxu0 0.0
    %1346 = vmatpush1.msra.mxu0 0.0
    %1347 = vmatprep.subr.mxu0 0.0
    %1348 = vmatpush1.msra.mxu0 0.0
    %1349 = vmatprep.subr.mxu0 0.0
    %1350 = vmatpush1.msra.mxu0 0.0
    %1351 = vmatprep.subr.mxu0 0.0
    %1352 = vmatpush1.msra.mxu0 0.0
    %1353 = vmatprep.subr.mxu0 0.0
    %1354 = vmatpush1.msra.mxu0 0.0
    %1355 = vmatprep.subr.mxu0 0.0
    %1356 = vmatpush1.msra.mxu0 0.0
    %1357 = vmatprep.subr.mxu0 0.0
    %1358 = vmatpush1.msra.mxu0 0.0
    %1359 = vmatprep.subr.mxu0 0.0
    %1360 = vmatpush1.msra.mxu0 0.0
    %1361 = vmatprep.mubr.f32.mxu0 0.0
    %v1362 = vand.u32 %v1185, 4294901760
    %1363 = vmatmul.mubr.f32.gmra.mrb[0].mxu0 %v1362
    %v1364 = vpop.f32.mrb[0].mxu0
    %v1365 = vadd.f32 %v1269, %v1364
    %v1366 = vpop.f32.mrb[0].mxu0
    %1367 = vmatprep.mubr.f32.mxu0 0.0
    %v1368 = vand.u32 %v1188, 4294901760
    %1369 = vmatmul.mubr.f32.gmra.mrb[0].mxu0 %v1368
    %v1370 = vpop.f32.mrb[0].mxu0
    %v1371 = vadd.f32 %v1279, %v1370
    %v1372 = vpop.f32.mrb[0].mxu0
    %1373 = vdwg.mxu0
    %1374 = vmatprep.subr.mxu0 0.0
    %v1375 = vand.u32 %v1166, 4294901760
    %v1376 = vsub.f32 %v1166, %v1375
    %1377 = vmatpush1.msra.mxu0 %v1376
    %1378 = vmatprep.subr.mxu0 0.0
    %v1379 = vand.u32 %v1167, 4294901760
    %v1380 = vsub.f32 %v1167, %v1379
    %1381 = vmatpush1.msra.mxu0 %v1380
    %1382 = vmatprep.subr.mxu0 0.0
    %v1383 = vand.u32 %v1192, 4294901760
    %v1384 = vsub.f32 %v1192, %v1383
    %1385 = vmatpush1.msra.mxu0 %v1384
    %1386 = vmatprep.subr.mxu0 0.0
    %1387 = vmatpush1.msra.mxu0 0.0
    %1388 = vmatprep.subr.mxu0 0.0
    %1389 = vmatpush1.msra.mxu0 0.0
    %1390 = vmatprep.subr.mxu0 0.0
    %1391 = vmatpush1.msra.mxu0 0.0
    %1392 = vmatprep.subr.mxu0 0.0
    %1393 = vmatpush1.msra.mxu0 0.0
    %1394 = vmatprep.subr.mxu0 0.0
    %1395 = vmatpush1.msra.mxu0 0.0
    %1396 = vmatprep.subr.mxu0 0.0
    %1397 = vmatpush1.msra.mxu0 0.0
    %1398 = vmatprep.subr.mxu0 0.0
    %1399 = vmatpush1.msra.mxu0 0.0
    %1400 = vmatprep.subr.mxu0 0.0
    %1401 = vmatpush1.msra.mxu0 0.0
    %1402 = vmatprep.subr.mxu0 0.0
    %1403 = vmatpush1.msra.mxu0 0.0
    %1404 = vmatprep.subr.mxu0 0.0
    %1405 = vmatpush1.msra.mxu0 0.0
    %1406 = vmatprep.subr.mxu0 0.0
    %1407 = vmatpush1.msra.mxu0 0.0
    %1408 = vmatprep.subr.mxu0 0.0
    %1409 = vmatpush1.msra.mxu0 0.0
    %1410 = vmatprep.subr.mxu0 0.0
    %1411 = vmatpush1.msra.mxu0 0.0
    %1412 = vmatprep.subr.mxu0 0.0
    %1413 = vmatpush1.msra.mxu0 0.0
    %1414 = vmatprep.subr.mxu0 0.0
    %1415 = vmatpush1.msra.mxu0 0.0
    %1416 = vmatprep.subr.mxu0 0.0
    %1417 = vmatpush1.msra.mxu0 0.0
    %1418 = vmatprep.subr.mxu0 0.0
    %1419 = vmatpush1.msra.mxu0 0.0
    %1420 = vmatprep.subr.mxu0 0.0
    %1421 = vmatpush1.msra.mxu0 0.0
    %1422 = vmatprep.subr.mxu0 0.0
    %1423 = vmatpush1.msra.mxu0 0.0
    %1424 = vmatprep.subr.mxu0 0.0
    %1425 = vmatpush1.msra.mxu0 0.0
    %1426 = vmatprep.subr.mxu0 0.0
    %1427 = vmatpush1.msra.mxu0 0.0
    %1428 = vmatprep.subr.mxu0 0.0
    %1429 = vmatpush1.msra.mxu0 0.0
    %1430 = vmatprep.subr.mxu0 0.0
    %1431 = vmatpush1.msra.mxu0 0.0
    %1432 = vmatprep.subr.mxu0 0.0
    %1433 = vmatpush1.msra.mxu0 0.0
    %1434 = vmatprep.subr.mxu0 0.0
    %1435 = vmatpush1.msra.mxu0 0.0
    %1436 = vmatprep.subr.mxu0 0.0
    %1437 = vmatpush1.msra.mxu0 0.0
    %1438 = vmatprep.subr.mxu0 0.0
    %1439 = vmatpush1.msra.mxu0 0.0
    %1440 = vmatprep.subr.mxu0 0.0
    %1441 = vmatpush1.msra.mxu0 0.0
    %1442 = vmatprep.subr.mxu0 0.0
    %1443 = vmatpush1.msra.mxu0 0.0
    %1444 = vmatprep.mubr.f32.mxu0 0.0
    %v1445 = vand.u32 %v1185, 4294901760
    %v1446 = vsub.f32 %v1185, %v1445
    %1447 = vmatmul.mubr.f32.gmra.mrb[0].mxu0 %v1446
    %v1448 = vpop.f32.mrb[0].mxu0
    %v1449 = vadd.f32 %v1365, %v1448
    %v1450 = vpop.f32.mrb[0].mxu0
    %1451 = vmatprep.mubr.f32.mxu0 0.0
    %v1452 = vand.u32 %v1188, 4294901760
    %v1453 = vsub.f32 %v1188, %v1452
    %1454 = vmatmul.mubr.f32.gmra.mrb[0].mxu0 %v1453
    %v1455 = vpop.f32.mrb[0].mxu0
    %v1456 = vadd.f32 %v1371, %v1455
    %v1457 = vpop.f32.mrb[0].mxu0
    %1458 = vdwg.mxu0
    %1459 = vmatprep.subr.mxu0 0.0
    %v1460 = vand.u32 %v1166, 4294901760
    %1461 = vmatpush1.msra.mxu0 %v1460
    %1462 = vmatprep.subr.mxu0 0.0
    %v1463 = vand.u32 %v1167, 4294901760
    %1464 = vmatpush1.msra.mxu0 %v1463
    %1465 = vmatprep.subr.mxu0 0.0
    %v1466 = vand.u32 %v1192, 4294901760
    %1467 = vmatpush1.msra.mxu0 %v1466
    %1468 = vmatprep.subr.mxu0 0.0
    %1469 = vmatpush1.msra.mxu0 0.0
    %1470 = vmatprep.subr.mxu0 0.0
    %1471 = vmatpush1.msra.mxu0 0.0
    %1472 = vmatprep.subr.mxu0 0.0
    %1473 = vmatpush1.msra.mxu0 0.0
    %1474 = vmatprep.subr.mxu0 0.0
    %1475 = vmatpush1.msra.mxu0 0.0
    %1476 = vmatprep.subr.mxu0 0.0
    %1477 = vmatpush1.msra.mxu0 0.0
    %1478 = vmatprep.subr.mxu0 0.0
    %1479 = vmatpush1.msra.mxu0 0.0
    %1480 = vmatprep.subr.mxu0 0.0
    %1481 = vmatpush1.msra.mxu0 0.0
    %1482 = vmatprep.subr.mxu0 0.0
    %1483 = vmatpush1.msra.mxu0 0.0
    %1484 = vmatprep.subr.mxu0 0.0
    %1485 = vmatpush1.msra.mxu0 0.0
    %1486 = vmatprep.subr.mxu0 0.0
    %1487 = vmatpush1.msra.mxu0 0.0
    %1488 = vmatprep.subr.mxu0 0.0
    %1489 = vmatpush1.msra.mxu0 0.0
    %1490 = vmatprep.subr.mxu0 0.0
    %1491 = vmatpush1.msra.mxu0 0.0
    %1492 = vmatprep.subr.mxu0 0.0
    %1493 = vmatpush1.msra.mxu0 0.0
    %1494 = vmatprep.subr.mxu0 0.0
    %1495 = vmatpush1.msra.mxu0 0.0
    %1496 = vmatprep.subr.mxu0 0.0
    %1497 = vmatpush1.msra.mxu0 0.0
    %1498 = vmatprep.subr.mxu0 0.0
    %1499 = vmatpush1.msra.mxu0 0.0
    %1500 = vmatprep.subr.mxu0 0.0
    %1501 = vmatpush1.msra.mxu0 0.0
    %1502 = vmatprep.subr.mxu0 0.0
    %1503 = vmatpush1.msra.mxu0 0.0
    %1504 = vmatprep.subr.mxu0 0.0
    %1505 = vmatpush1.msra.mxu0 0.0
    %1506 = vmatprep.subr.mxu0 0.0
    %1507 = vmatpush1.msra.mxu0 0.0
    %1508 = vmatprep.subr.mxu0 0.0
    %1509 = vmatpush1.msra.mxu0 0.0
    %1510 = vmatprep.subr.mxu0 0.0
    %1511 = vmatpush1.msra.mxu0 0.0
    %1512 = vmatprep.subr.mxu0 0.0
    %1513 = vmatpush1.msra.mxu0 0.0
    %1514 = vmatprep.subr.mxu0 0.0
    %1515 = vmatpush1.msra.mxu0 0.0
    %1516 = vmatprep.subr.mxu0 0.0
    %1517 = vmatpush1.msra.mxu0 0.0
    %1518 = vmatprep.subr.mxu0 0.0
    %1519 = vmatpush1.msra.mxu0 0.0
    %1520 = vmatprep.subr.mxu0 0.0
    %1521 = vmatpush1.msra.mxu0 0.0
    %1522 = vmatprep.subr.mxu0 0.0
    %1523 = vmatpush1.msra.mxu0 0.0
    %1524 = vmatprep.subr.mxu0 0.0
    %1525 = vmatpush1.msra.mxu0 0.0
    %1526 = vmatprep.mubr.f32.mxu0 0.0
    %v1527 = vand.u32 %v1185, 4294901760
    %v1528 = vsub.f32 %v1185, %v1527
    %v1529 = vand.u32 %v1528, 4294901760
    %1530 = vmatmul.mubr.f32.gmra.mrb[0].mxu0 %v1529
    %v1531 = vpop.f32.mrb[0].mxu0
    %v1532 = vadd.f32 %v1449, %v1531
    %v1533 = vpop.f32.mrb[0].mxu0
    %1534 = vmatprep.mubr.f32.mxu0 0.0
    %v1535 = vand.u32 %v1188, 4294901760
    %v1536 = vsub.f32 %v1188, %v1535
    %v1537 = vand.u32 %v1536, 4294901760
    %1538 = vmatmul.mubr.f32.gmra.mrb[0].mxu0 %v1537
    %v1539 = vpop.f32.mrb[0].mxu0
    %v1540 = vadd.f32 %v1456, %v1539
    %v1541 = vpop.f32.mrb[0].mxu0
    %1542 = vdwg.mxu0
    %1543 = vmatprep.subr.mxu0 0.0
    %v1544 = vand.u32 %v1166, 4294901760
    %v1545 = vsub.f32 %v1166, %v1544
    %v1546 = vand.u32 %v1545, 4294901760
    %1547 = vmatpush1.msra.mxu0 %v1546
    %1548 = vmatprep.subr.mxu0 0.0
    %v1549 = vand.u32 %v1167, 4294901760
    %v1550 = vsub.f32 %v1167, %v1549
    %v1551 = vand.u32 %v1550, 4294901760
    %1552 = vmatpush1.msra.mxu0 %v1551
    %1553 = vmatprep.subr.mxu0 0.0
    %v1554 = vand.u32 %v1192, 4294901760
    %v1555 = vsub.f32 %v1192, %v1554
    %v1556 = vand.u32 %v1555, 4294901760
    %1557 = vmatpush1.msra.mxu0 %v1556
    %1558 = vmatprep.subr.mxu0 0.0
    %1559 = vmatpush1.msra.mxu0 0.0
    %1560 = vmatprep.subr.mxu0 0.0
    %1561 = vmatpush1.msra.mxu0 0.0
    %1562 = vmatprep.subr.mxu0 0.0
    %1563 = vmatpush1.msra.mxu0 0.0
    %1564 = vmatprep.subr.mxu0 0.0
    %1565 = vmatpush1.msra.mxu0 0.0
    %1566 = vmatprep.subr.mxu0 0.0
    %1567 = vmatpush1.msra.mxu0 0.0
    %1568 = vmatprep.subr.mxu0 0.0
    %1569 = vmatpush1.msra.mxu0 0.0
    %1570 = vmatprep.subr.mxu0 0.0
    %1571 = vmatpush1.msra.mxu0 0.0
    %1572 = vmatprep.subr.mxu0 0.0
    %1573 = vmatpush1.msra.mxu0 0.0
    %1574 = vmatprep.subr.mxu0 0.0
    %1575 = vmatpush1.msra.mxu0 0.0
    %1576 = vmatprep.subr.mxu0 0.0
    %1577 = vmatpush1.msra.mxu0 0.0
    %1578 = vmatprep.subr.mxu0 0.0
    %1579 = vmatpush1.msra.mxu0 0.0
    %1580 = vmatprep.subr.mxu0 0.0
    %1581 = vmatpush1.msra.mxu0 0.0
    %1582 = vmatprep.subr.mxu0 0.0
    %1583 = vmatpush1.msra.mxu0 0.0
    %1584 = vmatprep.subr.mxu0 0.0
    %1585 = vmatpush1.msra.mxu0 0.0
    %1586 = vmatprep.subr.mxu0 0.0
    %1587 = vmatpush1.msra.mxu0 0.0
    %1588 = vmatprep.subr.mxu0 0.0
    %1589 = vmatpush1.msra.mxu0 0.0
    %1590 = vmatprep.subr.mxu0 0.0
    %1591 = vmatpush1.msra.mxu0 0.0
    %1592 = vmatprep.subr.mxu0 0.0
    %1593 = vmatpush1.msra.mxu0 0.0
    %1594 = vmatprep.subr.mxu0 0.0
    %1595 = vmatpush1.msra.mxu0 0.0
    %1596 = vmatprep.subr.mxu0 0.0
    %1597 = vmatpush1.msra.mxu0 0.0
    %1598 = vmatprep.subr.mxu0 0.0
    %1599 = vmatpush1.msra.mxu0 0.0
    %1600 = vmatprep.subr.mxu0 0.0
    %1601 = vmatpush1.msra.mxu0 0.0
    %1602 = vmatprep.subr.mxu0 0.0
    %1603 = vmatpush1.msra.mxu0 0.0
    %1604 = vmatprep.subr.mxu0 0.0
    %1605 = vmatpush1.msra.mxu0 0.0
    %1606 = vmatprep.subr.mxu0 0.0
    %1607 = vmatpush1.msra.mxu0 0.0
    %1608 = vmatprep.subr.mxu0 0.0
    %1609 = vmatpush1.msra.mxu0 0.0
    %1610 = vmatprep.subr.mxu0 0.0
    %1611 = vmatpush1.msra.mxu0 0.0
    %1612 = vmatprep.subr.mxu0 0.0
    %1613 = vmatpush1.msra.mxu0 0.0
    %1614 = vmatprep.subr.mxu0 0.0
    %1615 = vmatpush1.msra.mxu0 0.0
    %1616 = vmatprep.mubr.f32.mxu0 0.0
    %v1617 = vand.u32 %v1185, 4294901760
    %1618 = vmatmul.mubr.f32.gmra.mrb[0].mxu0 %v1617
    %v1619 = vpop.f32.mrb[0].mxu0
    %v1620 = vadd.f32 %v1532, %v1619
    %v1621 = vpop.f32.mrb[0].mxu0
    %1622 = vmatprep.mubr.f32.mxu0 0.0
    %v1623 = vand.u32 %v1188, 4294901760
    %1624 = vmatmul.mubr.f32.gmra.mrb[0].mxu0 %v1623
    %v1625 = vpop.f32.mrb[0].mxu0
    %v1626 = vadd.f32 %v1540, %v1625
    %v1627 = vpop.f32.mrb[0].mxu0
    %1628 = vdwg.mxu0
    %1629 = vmatprep.subr.mxu0 0.0
    %v1630 = vand.u32 %v1166, 4294901760
    %1631 = vmatpush1.msra.mxu0 %v1630
    %1632 = vmatprep.subr.mxu0 0.0
    %v1633 = vand.u32 %v1167, 4294901760
    %1634 = vmatpush1.msra.mxu0 %v1633
    %1635 = vmatprep.subr.mxu0 0.0
    %v1636 = vand.u32 %v1192, 4294901760
    %1637 = vmatpush1.msra.mxu0 %v1636
    %1638 = vmatprep.subr.mxu0 0.0
    %1639 = vmatpush1.msra.mxu0 0.0
    %1640 = vmatprep.subr.mxu0 0.0
    %1641 = vmatpush1.msra.mxu0 0.0
    %1642 = vmatprep.subr.mxu0 0.0
    %1643 = vmatpush1.msra.mxu0 0.0
    %1644 = vmatprep.subr.mxu0 0.0
    %1645 = vmatpush1.msra.mxu0 0.0
    %1646 = vmatprep.subr.mxu0 0.0
    %1647 = vmatpush1.msra.mxu0 0.0
    %1648 = vmatprep.subr.mxu0 0.0
    %1649 = vmatpush1.msra.mxu0 0.0
    %1650 = vmatprep.subr.mxu0 0.0
    %1651 = vmatpush1.msra.mxu0 0.0
    %1652 = vmatprep.subr.mxu0 0.0
    %1653 = vmatpush1.msra.mxu0 0.0
    %1654 = vmatprep.subr.mxu0 0.0
    %1655 = vmatpush1.msra.mxu0 0.0
    %1656 = vmatprep.subr.mxu0 0.0
    %1657 = vmatpush1.msra.mxu0 0.0
    %1658 = vmatprep.subr.mxu0 0.0
    %1659 = vmatpush1.msra.mxu0 0.0
    %1660 = vmatprep.subr.mxu0 0.0
    %1661 = vmatpush1.msra.mxu0 0.0
    %1662 = vmatprep.subr.mxu0 0.0
    %1663 = vmatpush1.msra.mxu0 0.0
    %1664 = vmatprep.subr.mxu0 0.0
    %1665 = vmatpush1.msra.mxu0 0.0
    %1666 = vmatprep.subr.mxu0 0.0
    %1667 = vmatpush1.msra.mxu0 0.0
    %1668 = vmatprep.subr.mxu0 0.0
    %1669 = vmatpush1.msra.mxu0 0.0
    %1670 = vmatprep.subr.mxu0 0.0
    %1671 = vmatpush1.msra.mxu0 0.0
    %1672 = vmatprep.subr.mxu0 0.0
    %1673 = vmatpush1.msra.mxu0 0.0
    %1674 = vmatprep.subr.mxu0 0.0
    %1675 = vmatpush1.msra.mxu0 0.0
    %1676 = vmatprep.subr.mxu0 0.0
    %1677 = vmatpush1.msra.mxu0 0.0
    %1678 = vmatprep.subr.mxu0 0.0
    %1679 = vmatpush1.msra.mxu0 0.0
    %1680 = vmatprep.subr.mxu0 0.0
    %1681 = vmatpush1.msra.mxu0 0.0
    %1682 = vmatprep.subr.mxu0 0.0
    %1683 = vmatpush1.msra.mxu0 0.0
    %1684 = vmatprep.subr.mxu0 0.0
    %1685 = vmatpush1.msra.mxu0 0.0
    %1686 = vmatprep.subr.mxu0 0.0
    %1687 = vmatpush1.msra.mxu0 0.0
    %1688 = vmatprep.subr.mxu0 0.0
    %1689 = vmatpush1.msra.mxu0 0.0
    %1690 = vmatprep.subr.mxu0 0.0
    %1691 = vmatpush1.msra.mxu0 0.0
    %1692 = vmatprep.subr.mxu0 0.0
    %1693 = vmatpush1.msra.mxu0 0.0
    %1694 = vmatprep.subr.mxu0 0.0
    %1695 = vmatpush1.msra.mxu0 0.0
    %1696 = vmatprep.mubr.f32.mxu0 0.0
    %v1697 = vand.u32 %v1185, 4294901760
    %1698 = vmatmul.mubr.f32.gmra.mrb[0].mxu0 %v1697
    %v1699 = vpop.f32.mrb[0].mxu0
    %v1700 = vadd.f32 %v1620, %v1699
    %v1701 = vpop.f32.mrb[0].mxu0
    %1702 = vmatprep.mubr.f32.mxu0 0.0
    %v1703 = vand.u32 %v1188, 4294901760
    %1704 = vmatmul.mubr.f32.gmra.mrb[0].mxu0 %v1703
    %v1705 = vpop.f32.mrb[0].mxu0
    %v1706 = vadd.f32 %v1626, %v1705
    %v1707 = vpop.f32.mrb[0].mxu0
    %1708 = vdwg.mxu0
    %v1709 = vmax.f32 %v1700, 0.0
    %v1710 = vmax.f32 %v1706, 0.0
    %v1711 = vld [vmem:[%s7] sm:$0x1f]
    %v1712 = vld [vmem:[%s8] sm:$0x1f]
    %1714 = vset.pattern.permute.xlu0 0
    %1715 = vperm.xlu0 %1714, %v1712
    %v1716 = vpop.permute.xlu0 %1715
    %v1719 = vsel %vm607, %v1711, 0
    %v1722 = vsel %vm617, %v1710, 0
    %1724 = vmatprep.subr.mxu0 0.0
    %v1725 = vand.u32 %v1709, 4294901760
    %1726 = vmatpush1.msra.mxu0 %v1725
    %1727 = vmatprep.subr.mxu0 0.0
    %v1728 = vand.u32 %v1722, 4294901760
    %1729 = vmatpush1.msra.mxu0 %v1728
    %1730 = vmatprep.subr.mxu0 0.0
    %1731 = vmatpush1.msra.mxu0 0.0
    %1732 = vmatprep.subr.mxu0 0.0
    %1733 = vmatpush1.msra.mxu0 0.0
    %1734 = vmatprep.subr.mxu0 0.0
    %1735 = vmatpush1.msra.mxu0 0.0
    %1736 = vmatprep.subr.mxu0 0.0
    %1737 = vmatpush1.msra.mxu0 0.0
    %1738 = vmatprep.subr.mxu0 0.0
    %1739 = vmatpush1.msra.mxu0 0.0
    %1740 = vmatprep.subr.mxu0 0.0
    %1741 = vmatpush1.msra.mxu0 0.0
    %1742 = vmatprep.subr.mxu0 0.0
    %1743 = vmatpush1.msra.mxu0 0.0
    %1744 = vmatprep.subr.mxu0 0.0
    %1745 = vmatpush1.msra.mxu0 0.0
    %1746 = vmatprep.subr.mxu0 0.0
    %1747 = vmatpush1.msra.mxu0 0.0
    %1748 = vmatprep.subr.mxu0 0.0
    %1749 = vmatpush1.msra.mxu0 0.0
    %1750 = vmatprep.subr.mxu0 0.0
    %1751 = vmatpush1.msra.mxu0 0.0
    %1752 = vmatprep.subr.mxu0 0.0
    %1753 = vmatpush1.msra.mxu0 0.0
    %1754 = vmatprep.subr.mxu0 0.0
    %1755 = vmatpush1.msra.mxu0 0.0
    %1756 = vmatprep.subr.mxu0 0.0
    %1757 = vmatpush1.msra.mxu0 0.0
    %1758 = vmatprep.subr.mxu0 0.0
    %1759 = vmatpush1.msra.mxu0 0.0
    %1760 = vmatprep.subr.mxu0 0.0
    %1761 = vmatpush1.msra.mxu0 0.0
    %1762 = vmatprep.subr.mxu0 0.0
    %1763 = vmatpush1.msra.mxu0 0.0
    %1764 = vmatprep.subr.mxu0 0.0
    %1765 = vmatpush1.msra.mxu0 0.0
    %1766 = vmatprep.subr.mxu0 0.0
    %1767 = vmatpush1.msra.mxu0 0.0
    %1768 = vmatprep.subr.mxu0 0.0
    %1769 = vmatpush1.msra.mxu0 0.0
    %1770 = vmatprep.subr.mxu0 0.0
    %1771 = vmatpush1.msra.mxu0 0.0
    %1772 = vmatprep.subr.mxu0 0.0
    %1773 = vmatpush1.msra.mxu0 0.0
    %1774 = vmatprep.subr.mxu0 0.0
    %1775 = vmatpush1.msra.mxu0 0.0
    %1776 = vmatprep.subr.mxu0 0.0
    %1777 = vmatpush1.msra.mxu0 0.0
    %1778 = vmatprep.subr.mxu0 0.0
    %1779 = vmatpush1.msra.mxu0 0.0
    %1780 = vmatprep.subr.mxu0 0.0
    %1781 = vmatpush1.msra.mxu0 0.0
    %1782 = vmatprep.subr.mxu0 0.0
    %1783 = vmatpush1.msra.mxu0 0.0
    %1784 = vmatprep.subr.mxu0 0.0
    %1785 = vmatpush1.msra.mxu0 0.0
    %1786 = vmatprep.subr.mxu0 0.0
    %1787 = vmatpush1.msra.mxu0 0.0
    %1788 = vmatprep.subr.mxu0 0.0
    %1789 = vmatpush1.msra.mxu0 0.0
    %1790 = vmatprep.mubr.f32.mxu0 0.0
    %v1791 = vand.u32 %v1719, 4294901760
    %v1792 = vsub.f32 %v1719, %v1791
    %v1793 = vand.u32 %v1792, 4294901760
    %v1794 = vsub.f32 %v1792, %v1793
    %v1795 = vand.u32 %v1794, 4294901760
    %1796 = vmatmul.mubr.f32.gmra.mrb[0].mxu0 %v1795
    %v1797 = vpop.f32.mrb[0].mxu0
    %v1798 = vadd.f32 %v1716, %v1797
    %v1799 = vpop.f32.mrb[0].mxu0
    %1800 = vdwg.mxu0
    %1801 = vmatprep.subr.mxu0 0.0
    %v1802 = vand.u32 %v1709, 4294901760
    %v1803 = vsub.f32 %v1709, %v1802
    %v1804 = vand.u32 %v1803, 4294901760
    %v1805 = vsub.f32 %v1803, %v1804
    %v1806 = vand.u32 %v1805, 4294901760
    %1807 = vmatpush1.msra.mxu0 %v1806
    %1808 = vmatprep.subr.mxu0 0.0
    %v1809 = vand.u32 %v1722, 4294901760
    %v1810 = vsub.f32 %v1722, %v1809
    %v1811 = vand.u32 %v1810, 4294901760
    %v1812 = vsub.f32 %v1810, %v1811
    %v1813 = vand.u32 %v1812, 4294901760
    %1814 = vmatpush1.msra.mxu0 %v1813
    %1815 = vmatprep.subr.mxu0 0.0
    %1816 = vmatpush1.msra.mxu0 0.0
    %1817 = vmatprep.subr.mxu0 0.0
    %1818 = vmatpush1.msra.mxu0 0.0
    %1819 = vmatprep.subr.mxu0 0.0
    %1820 = vmatpush1.msra.mxu0 0.0
    %1821 = vmatprep.subr.mxu0 0.0
    %1822 = vmatpush1.msra.mxu0 0.0
    %1823 = vmatprep.subr.mxu0 0.0
    %1824 = vmatpush1.msra.mxu0 0.0
    %1825 = vmatprep.subr.mxu0 0.0
    %1826 = vmatpush1.msra.mxu0 0.0
    %1827 = vmatprep.subr.mxu0 0.0
    %1828 = vmatpush1.msra.mxu0 0.0
    %1829 = vmatprep.subr.mxu0 0.0
    %1830 = vmatpush1.msra.mxu0 0.0
    %1831 = vmatprep.subr.mxu0 0.0
    %1832 = vmatpush1.msra.mxu0 0.0
    %1833 = vmatprep.subr.mxu0 0.0
    %1834 = vmatpush1.msra.mxu0 0.0
    %1835 = vmatprep.subr.mxu0 0.0
    %1836 = vmatpush1.msra.mxu0 0.0
    %1837 = vmatprep.subr.mxu0 0.0
    %1838 = vmatpush1.msra.mxu0 0.0
    %1839 = vmatprep.subr.mxu0 0.0
    %1840 = vmatpush1.msra.mxu0 0.0
    %1841 = vmatprep.subr.mxu0 0.0
    %1842 = vmatpush1.msra.mxu0 0.0
    %1843 = vmatprep.subr.mxu0 0.0
    %1844 = vmatpush1.msra.mxu0 0.0
    %1845 = vmatprep.subr.mxu0 0.0
    %1846 = vmatpush1.msra.mxu0 0.0
    %1847 = vmatprep.subr.mxu0 0.0
    %1848 = vmatpush1.msra.mxu0 0.0
    %1849 = vmatprep.subr.mxu0 0.0
    %1850 = vmatpush1.msra.mxu0 0.0
    %1851 = vmatprep.subr.mxu0 0.0
    %1852 = vmatpush1.msra.mxu0 0.0
    %1853 = vmatprep.subr.mxu0 0.0
    %1854 = vmatpush1.msra.mxu0 0.0
    %1855 = vmatprep.subr.mxu0 0.0
    %1856 = vmatpush1.msra.mxu0 0.0
    %1857 = vmatprep.subr.mxu0 0.0
    %1858 = vmatpush1.msra.mxu0 0.0
    %1859 = vmatprep.subr.mxu0 0.0
    %1860 = vmatpush1.msra.mxu0 0.0
    %1861 = vmatprep.subr.mxu0 0.0
    %1862 = vmatpush1.msra.mxu0 0.0
    %1863 = vmatprep.subr.mxu0 0.0
    %1864 = vmatpush1.msra.mxu0 0.0
    %1865 = vmatprep.subr.mxu0 0.0
    %1866 = vmatpush1.msra.mxu0 0.0
    %1867 = vmatprep.subr.mxu0 0.0
    %1868 = vmatpush1.msra.mxu0 0.0
    %1869 = vmatprep.subr.mxu0 0.0
    %1870 = vmatpush1.msra.mxu0 0.0
    %1871 = vmatprep.subr.mxu0 0.0
    %1872 = vmatpush1.msra.mxu0 0.0
    %1873 = vmatprep.subr.mxu0 0.0
    %1874 = vmatpush1.msra.mxu0 0.0
    %1875 = vmatprep.mubr.f32.mxu0 0.0
    %v1876 = vand.u32 %v1719, 4294901760
    %1877 = vmatmul.mubr.f32.gmra.mrb[0].mxu0 %v1876
    %v1878 = vpop.f32.mrb[0].mxu0
    %v1879 = vadd.f32 %v1798, %v1878
    %v1880 = vpop.f32.mrb[0].mxu0
    %1881 = vdwg.mxu0
    %1882 = vmatprep.subr.mxu0 0.0
    %v1883 = vand.u32 %v1709, 4294901760
    %v1884 = vsub.f32 %v1709, %v1883
    %1885 = vmatpush1.msra.mxu0 %v1884
    %1886 = vmatprep.subr.mxu0 0.0
    %v1887 = vand.u32 %v1722, 4294901760
    %v1888 = vsub.f32 %v1722, %v1887
    %1889 = vmatpush1.msra.mxu0 %v1888
    %1890 = vmatprep.subr.mxu0 0.0
    %1891 = vmatpush1.msra.mxu0 0.0
    %1892 = vmatprep.subr.mxu0 0.0
    %1893 = vmatpush1.msra.mxu0 0.0
    %1894 = vmatprep.subr.mxu0 0.0
    %1895 = vmatpush1.msra.mxu0 0.0
    %1896 = vmatprep.subr.mxu0 0.0
    %1897 = vmatpush1.msra.mxu0 0.0
    %1898 = vmatprep.subr.mxu0 0.0
    %1899 = vmatpush1.msra.mxu0 0.0
    %1900 = vmatprep.subr.mxu0 0.0
    %1901 = vmatpush1.msra.mxu0 0.0
    %1902 = vmatprep.subr.mxu0 0.0
    %1903 = vmatpush1.msra.mxu0 0.0
    %1904 = vmatprep.subr.mxu0 0.0
    %1905 = vmatpush1.msra.mxu0 0.0
    %1906 = vmatprep.subr.mxu0 0.0
    %1907 = vmatpush1.msra.mxu0 0.0
    %1908 = vmatprep.subr.mxu0 0.0
    %1909 = vmatpush1.msra.mxu0 0.0
    %1910 = vmatprep.subr.mxu0 0.0
    %1911 = vmatpush1.msra.mxu0 0.0
    %1912 = vmatprep.subr.mxu0 0.0
    %1913 = vmatpush1.msra.mxu0 0.0
    %1914 = vmatprep.subr.mxu0 0.0
    %1915 = vmatpush1.msra.mxu0 0.0
    %1916 = vmatprep.subr.mxu0 0.0
    %1917 = vmatpush1.msra.mxu0 0.0
    %1918 = vmatprep.subr.mxu0 0.0
    %1919 = vmatpush1.msra.mxu0 0.0
    %1920 = vmatprep.subr.mxu0 0.0
    %1921 = vmatpush1.msra.mxu0 0.0
    %1922 = vmatprep.subr.mxu0 0.0
    %1923 = vmatpush1.msra.mxu0 0.0
    %1924 = vmatprep.subr.mxu0 0.0
    %1925 = vmatpush1.msra.mxu0 0.0
    %1926 = vmatprep.subr.mxu0 0.0
    %1927 = vmatpush1.msra.mxu0 0.0
    %1928 = vmatprep.subr.mxu0 0.0
    %1929 = vmatpush1.msra.mxu0 0.0
    %1930 = vmatprep.subr.mxu0 0.0
    %1931 = vmatpush1.msra.mxu0 0.0
    %1932 = vmatprep.subr.mxu0 0.0
    %1933 = vmatpush1.msra.mxu0 0.0
    %1934 = vmatprep.subr.mxu0 0.0
    %1935 = vmatpush1.msra.mxu0 0.0
    %1936 = vmatprep.subr.mxu0 0.0
    %1937 = vmatpush1.msra.mxu0 0.0
    %1938 = vmatprep.subr.mxu0 0.0
    %1939 = vmatpush1.msra.mxu0 0.0
    %1940 = vmatprep.subr.mxu0 0.0
    %1941 = vmatpush1.msra.mxu0 0.0
    %1942 = vmatprep.subr.mxu0 0.0
    %1943 = vmatpush1.msra.mxu0 0.0
    %1944 = vmatprep.subr.mxu0 0.0
    %1945 = vmatpush1.msra.mxu0 0.0
    %1946 = vmatprep.subr.mxu0 0.0
    %1947 = vmatpush1.msra.mxu0 0.0
    %1948 = vmatprep.subr.mxu0 0.0
    %1949 = vmatpush1.msra.mxu0 0.0
    %1950 = vmatprep.mubr.f32.mxu0 0.0
    %v1951 = vand.u32 %v1719, 4294901760
    %v1952 = vsub.f32 %v1719, %v1951
    %1953 = vmatmul.mubr.f32.gmra.mrb[0].mxu0 %v1952
    %v1954 = vpop.f32.mrb[0].mxu0
    %v1955 = vadd.f32 %v1879, %v1954
    %v1956 = vpop.f32.mrb[0].mxu0
    %1957 = vdwg.mxu0
    %1958 = vmatprep.subr.mxu0 0.0
    %v1959 = vand.u32 %v1709, 4294901760
    %1960 = vmatpush1.msra.mxu0 %v1959
    %1961 = vmatprep.subr.mxu0 0.0
    %v1962 = vand.u32 %v1722, 4294901760
    %1963 = vmatpush1.msra.mxu0 %v1962
    %1964 = vmatprep.subr.mxu0 0.0
    %1965 = vmatpush1.msra.mxu0 0.0
    %1966 = vmatprep.subr.mxu0 0.0
    %1967 = vmatpush1.msra.mxu0 0.0
    %1968 = vmatprep.subr.mxu0 0.0
    %1969 = vmatpush1.msra.mxu0 0.0
    %1970 = vmatprep.subr.mxu0 0.0
    %1971 = vmatpush1.msra.mxu0 0.0
    %1972 = vmatprep.subr.mxu0 0.0
    %1973 = vmatpush1.msra.mxu0 0.0
    %1974 = vmatprep.subr.mxu0 0.0
    %1975 = vmatpush1.msra.mxu0 0.0
    %1976 = vmatprep.subr.mxu0 0.0
    %1977 = vmatpush1.msra.mxu0 0.0
    %1978 = vmatprep.subr.mxu0 0.0
    %1979 = vmatpush1.msra.mxu0 0.0
    %1980 = vmatprep.subr.mxu0 0.0
    %1981 = vmatpush1.msra.mxu0 0.0
    %1982 = vmatprep.subr.mxu0 0.0
    %1983 = vmatpush1.msra.mxu0 0.0
    %1984 = vmatprep.subr.mxu0 0.0
    %1985 = vmatpush1.msra.mxu0 0.0
    %1986 = vmatprep.subr.mxu0 0.0
    %1987 = vmatpush1.msra.mxu0 0.0
    %1988 = vmatprep.subr.mxu0 0.0
    %1989 = vmatpush1.msra.mxu0 0.0
    %1990 = vmatprep.subr.mxu0 0.0
    %1991 = vmatpush1.msra.mxu0 0.0
    %1992 = vmatprep.subr.mxu0 0.0
    %1993 = vmatpush1.msra.mxu0 0.0
    %1994 = vmatprep.subr.mxu0 0.0
    %1995 = vmatpush1.msra.mxu0 0.0
    %1996 = vmatprep.subr.mxu0 0.0
    %1997 = vmatpush1.msra.mxu0 0.0
    %1998 = vmatprep.subr.mxu0 0.0
    %1999 = vmatpush1.msra.mxu0 0.0
    %2000 = vmatprep.subr.mxu0 0.0
    %2001 = vmatpush1.msra.mxu0 0.0
    %2002 = vmatprep.subr.mxu0 0.0
    %2003 = vmatpush1.msra.mxu0 0.0
    %2004 = vmatprep.subr.mxu0 0.0
    %2005 = vmatpush1.msra.mxu0 0.0
    %2006 = vmatprep.subr.mxu0 0.0
    %2007 = vmatpush1.msra.mxu0 0.0
    %2008 = vmatprep.subr.mxu0 0.0
    %2009 = vmatpush1.msra.mxu0 0.0
    %2010 = vmatprep.subr.mxu0 0.0
    %2011 = vmatpush1.msra.mxu0 0.0
    %2012 = vmatprep.subr.mxu0 0.0
    %2013 = vmatpush1.msra.mxu0 0.0
    %2014 = vmatprep.subr.mxu0 0.0
    %2015 = vmatpush1.msra.mxu0 0.0
    %2016 = vmatprep.subr.mxu0 0.0
    %2017 = vmatpush1.msra.mxu0 0.0
    %2018 = vmatprep.subr.mxu0 0.0
    %2019 = vmatpush1.msra.mxu0 0.0
    %2020 = vmatprep.subr.mxu0 0.0
    %2021 = vmatpush1.msra.mxu0 0.0
    %2022 = vmatprep.subr.mxu0 0.0
    %2023 = vmatpush1.msra.mxu0 0.0
    %2024 = vmatprep.mubr.f32.mxu0 0.0
    %v2025 = vand.u32 %v1719, 4294901760
    %v2026 = vsub.f32 %v1719, %v2025
    %v2027 = vand.u32 %v2026, 4294901760
    %2028 = vmatmul.mubr.f32.gmra.mrb[0].mxu0 %v2027
    %v2029 = vpop.f32.mrb[0].mxu0
    %v2030 = vadd.f32 %v1955, %v2029
    %v2031 = vpop.f32.mrb[0].mxu0
    %2032 = vdwg.mxu0
    %2033 = vmatprep.subr.mxu0 0.0
    %v2034 = vand.u32 %v1709, 4294901760
    %v2035 = vsub.f32 %v1709, %v2034
    %v2036 = vand.u32 %v2035, 4294901760
    %2037 = vmatpush1.msra.mxu0 %v2036
    %2038 = vmatprep.subr.mxu0 0.0
    %v2039 = vand.u32 %v1722, 4294901760
    %v2040 = vsub.f32 %v1722, %v2039
    %v2041 = vand.u32 %v2040, 4294901760
    %2042 = vmatpush1.msra.mxu0 %v2041
    %2043 = vmatprep.subr.mxu0 0.0
    %2044 = vmatpush1.msra.mxu0 0.0
    %2045 = vmatprep.subr.mxu0 0.0
    %2046 = vmatpush1.msra.mxu0 0.0
    %2047 = vmatprep.subr.mxu0 0.0
    %2048 = vmatpush1.msra.mxu0 0.0
    %2049 = vmatprep.subr.mxu0 0.0
    %2050 = vmatpush1.msra.mxu0 0.0
    %2051 = vmatprep.subr.mxu0 0.0
    %2052 = vmatpush1.msra.mxu0 0.0
    %2053 = vmatprep.subr.mxu0 0.0
    %2054 = vmatpush1.msra.mxu0 0.0
    %2055 = vmatprep.subr.mxu0 0.0
    %2056 = vmatpush1.msra.mxu0 0.0
    %2057 = vmatprep.subr.mxu0 0.0
    %2058 = vmatpush1.msra.mxu0 0.0
    %2059 = vmatprep.subr.mxu0 0.0
    %2060 = vmatpush1.msra.mxu0 0.0
    %2061 = vmatprep.subr.mxu0 0.0
    %2062 = vmatpush1.msra.mxu0 0.0
    %2063 = vmatprep.subr.mxu0 0.0
    %2064 = vmatpush1.msra.mxu0 0.0
    %2065 = vmatprep.subr.mxu0 0.0
    %2066 = vmatpush1.msra.mxu0 0.0
    %2067 = vmatprep.subr.mxu0 0.0
    %2068 = vmatpush1.msra.mxu0 0.0
    %2069 = vmatprep.subr.mxu0 0.0
    %2070 = vmatpush1.msra.mxu0 0.0
    %2071 = vmatprep.subr.mxu0 0.0
    %2072 = vmatpush1.msra.mxu0 0.0
    %2073 = vmatprep.subr.mxu0 0.0
    %2074 = vmatpush1.msra.mxu0 0.0
    %2075 = vmatprep.subr.mxu0 0.0
    %2076 = vmatpush1.msra.mxu0 0.0
    %2077 = vmatprep.subr.mxu0 0.0
    %2078 = vmatpush1.msra.mxu0 0.0
    %2079 = vmatprep.subr.mxu0 0.0
    %2080 = vmatpush1.msra.mxu0 0.0
    %2081 = vmatprep.subr.mxu0 0.0
    %2082 = vmatpush1.msra.mxu0 0.0
    %2083 = vmatprep.subr.mxu0 0.0
    %2084 = vmatpush1.msra.mxu0 0.0
    %2085 = vmatprep.subr.mxu0 0.0
    %2086 = vmatpush1.msra.mxu0 0.0
    %2087 = vmatprep.subr.mxu0 0.0
    %2088 = vmatpush1.msra.mxu0 0.0
    %2089 = vmatprep.subr.mxu0 0.0
    %2090 = vmatpush1.msra.mxu0 0.0
    %2091 = vmatprep.subr.mxu0 0.0
    %2092 = vmatpush1.msra.mxu0 0.0
    %2093 = vmatprep.subr.mxu0 0.0
    %2094 = vmatpush1.msra.mxu0 0.0
    %2095 = vmatprep.subr.mxu0 0.0
    %2096 = vmatpush1.msra.mxu0 0.0
    %2097 = vmatprep.subr.mxu0 0.0
    %2098 = vmatpush1.msra.mxu0 0.0
    %2099 = vmatprep.subr.mxu0 0.0
    %2100 = vmatpush1.msra.mxu0 0.0
    %2101 = vmatprep.subr.mxu0 0.0
    %2102 = vmatpush1.msra.mxu0 0.0
    %2103 = vmatprep.mubr.f32.mxu0 0.0
    %v2104 = vand.u32 %v1719, 4294901760
    %2105 = vmatmul.mubr.f32.gmra.mrb[0].mxu0 %v2104
    %v2106 = vpop.f32.mrb[0].mxu0
    %v2107 = vadd.f32 %v2030, %v2106
    %v2108 = vpop.f32.mrb[0].mxu0
    %2109 = vdwg.mxu0
    %2110 = vmatprep.subr.mxu0 0.0
    %v2111 = vand.u32 %v1709, 4294901760
    %2112 = vmatpush1.msra.mxu0 %v2111
    %2113 = vmatprep.subr.mxu0 0.0
    %v2114 = vand.u32 %v1722, 4294901760
    %2115 = vmatpush1.msra.mxu0 %v2114
    %2116 = vmatprep.subr.mxu0 0.0
    %2117 = vmatpush1.msra.mxu0 0.0
    %2118 = vmatprep.subr.mxu0 0.0
    %2119 = vmatpush1.msra.mxu0 0.0
    %2120 = vmatprep.subr.mxu0 0.0
    %2121 = vmatpush1.msra.mxu0 0.0
    %2122 = vmatprep.subr.mxu0 0.0
    %2123 = vmatpush1.msra.mxu0 0.0
    %2124 = vmatprep.subr.mxu0 0.0
    %2125 = vmatpush1.msra.mxu0 0.0
    %2126 = vmatprep.subr.mxu0 0.0
    %2127 = vmatpush1.msra.mxu0 0.0
    %2128 = vmatprep.subr.mxu0 0.0
    %2129 = vmatpush1.msra.mxu0 0.0
    %2130 = vmatprep.subr.mxu0 0.0
    %2131 = vmatpush1.msra.mxu0 0.0
    %2132 = vmatprep.subr.mxu0 0.0
    %2133 = vmatpush1.msra.mxu0 0.0
    %2134 = vmatprep.subr.mxu0 0.0
    %2135 = vmatpush1.msra.mxu0 0.0
    %2136 = vmatprep.subr.mxu0 0.0
    %2137 = vmatpush1.msra.mxu0 0.0
    %2138 = vmatprep.subr.mxu0 0.0
    %2139 = vmatpush1.msra.mxu0 0.0
    %2140 = vmatprep.subr.mxu0 0.0
    %2141 = vmatpush1.msra.mxu0 0.0
    %2142 = vmatprep.subr.mxu0 0.0
    %2143 = vmatpush1.msra.mxu0 0.0
    %2144 = vmatprep.subr.mxu0 0.0
    %2145 = vmatpush1.msra.mxu0 0.0
    %2146 = vmatprep.subr.mxu0 0.0
    %2147 = vmatpush1.msra.mxu0 0.0
    %2148 = vmatprep.subr.mxu0 0.0
    %2149 = vmatpush1.msra.mxu0 0.0
    %2150 = vmatprep.subr.mxu0 0.0
    %2151 = vmatpush1.msra.mxu0 0.0
    %2152 = vmatprep.subr.mxu0 0.0
    %2153 = vmatpush1.msra.mxu0 0.0
    %2154 = vmatprep.subr.mxu0 0.0
    %2155 = vmatpush1.msra.mxu0 0.0
    %2156 = vmatprep.subr.mxu0 0.0
    %2157 = vmatpush1.msra.mxu0 0.0
    %2158 = vmatprep.subr.mxu0 0.0
    %2159 = vmatpush1.msra.mxu0 0.0
    %2160 = vmatprep.subr.mxu0 0.0
    %2161 = vmatpush1.msra.mxu0 0.0
    %2162 = vmatprep.subr.mxu0 0.0
    %2163 = vmatpush1.msra.mxu0 0.0
    %2164 = vmatprep.subr.mxu0 0.0
    %2165 = vmatpush1.msra.mxu0 0.0
    %2166 = vmatprep.subr.mxu0 0.0
    %2167 = vmatpush1.msra.mxu0 0.0
    %2168 = vmatprep.subr.mxu0 0.0
    %2169 = vmatpush1.msra.mxu0 0.0
    %2170 = vmatprep.subr.mxu0 0.0
    %2171 = vmatpush1.msra.mxu0 0.0
    %2172 = vmatprep.subr.mxu0 0.0
    %2173 = vmatpush1.msra.mxu0 0.0
    %2174 = vmatprep.subr.mxu0 0.0
    %2175 = vmatpush1.msra.mxu0 0.0
    %2176 = vmatprep.mubr.f32.mxu0 0.0
    %v2177 = vand.u32 %v1719, 4294901760
    %2178 = vmatmul.mubr.f32.gmra.mrb[0].mxu0 %v2177
    %v2179 = vpop.f32.mrb[0].mxu0
    %v2180 = vadd.f32 %v2107, %v2179
    %v2181 = vpop.f32.mrb[0].mxu0
    %2182 = vdwg.mxu0
    %v2183 = vmax.f32 %v2180, 0.0
    %v2184 = vld [vmem:[%s9] sm:$0x1]
    %v2185 = vld [vmem:[#allocation2] sm:$0x1]
    %2187 = vset.pattern.permute.xlu0 0
    %2188 = vperm.xlu0 %2187, %v2185
    %v2189 = vpop.permute.xlu0 %2188
    %v2191 = vlaneseq
    %v2192 = vshrl.u32 %v2191, 7
    %v2193 = vsub.s32 0, %v2192
    %v2194 = vrot.slane %v2189, %v2193
    %vm2195 = vcmask 39936
    %v2197 = vsel %vm2195, %v2184, 0
    %vm2199 = vcmask 1044480
    %v2201 = vsel %vm2199, %v2183, 0
    %2203 = vmatprep.subr.mxu0 0.0
    %v2204 = vand.u32 %v2201, 4294901760
    %2205 = vmatpush1.msra.mxu0 %v2204
    %2206 = vmatprep.subr.mxu0 0.0
    %2207 = vmatpush1.msra.mxu0 0.0
    %2208 = vmatprep.subr.mxu0 0.0
    %2209 = vmatpush1.msra.mxu0 0.0
    %2210 = vmatprep.subr.mxu0 0.0
    %2211 = vmatpush1.msra.mxu0 0.0
    %2212 = vmatprep.subr.mxu0 0.0
    %2213 = vmatpush1.msra.mxu0 0.0
    %2214 = vmatprep.subr.mxu0 0.0
    %2215 = vmatpush1.msra.mxu0 0.0
    %2216 = vmatprep.subr.mxu0 0.0
    %2217 = vmatpush1.msra.mxu0 0.0
    %2218 = vmatprep.subr.mxu0 0.0
    %2219 = vmatpush1.msra.mxu0 0.0
    %2220 = vmatprep.subr.mxu0 0.0
    %2221 = vmatpush1.msra.mxu0 0.0
    %2222 = vmatprep.subr.mxu0 0.0
    %2223 = vmatpush1.msra.mxu0 0.0
    %2224 = vmatprep.subr.mxu0 0.0
    %2225 = vmatpush1.msra.mxu0 0.0
    %2226 = vmatprep.subr.mxu0 0.0
    %2227 = vmatpush1.msra.mxu0 0.0
    %2228 = vmatprep.subr.mxu0 0.0
    %2229 = vmatpush1.msra.mxu0 0.0
    %2230 = vmatprep.subr.mxu0 0.0
    %2231 = vmatpush1.msra.mxu0 0.0
    %2232 = vmatprep.subr.mxu0 0.0
    %2233 = vmatpush1.msra.mxu0 0.0
    %2234 = vmatprep.subr.mxu0 0.0
    %2235 = vmatpush1.msra.mxu0 0.0
    %2236 = vmatprep.subr.mxu0 0.0
    %2237 = vmatpush1.msra.mxu0 0.0
    %2238 = vmatprep.subr.mxu0 0.0
    %2239 = vmatpush1.msra.mxu0 0.0
    %2240 = vmatprep.subr.mxu0 0.0
    %2241 = vmatpush1.msra.mxu0 0.0
    %2242 = vmatprep.subr.mxu0 0.0
    %2243 = vmatpush1.msra.mxu0 0.0
    %2244 = vmatprep.subr.mxu0 0.0
    %2245 = vmatpush1.msra.mxu0 0.0
    %2246 = vmatprep.subr.mxu0 0.0
    %2247 = vmatpush1.msra.mxu0 0.0
    %2248 = vmatprep.subr.mxu0 0.0
    %2249 = vmatpush1.msra.mxu0 0.0
    %2250 = vmatprep.subr.mxu0 0.0
    %2251 = vmatpush1.msra.mxu0 0.0
    %2252 = vmatprep.subr.mxu0 0.0
    %2253 = vmatpush1.msra.mxu0 0.0
    %2254 = vmatprep.subr.mxu0 0.0
    %2255 = vmatpush1.msra.mxu0 0.0
    %2256 = vmatprep.subr.mxu0 0.0
    %2257 = vmatpush1.msra.mxu0 0.0
    %2258 = vmatprep.subr.mxu0 0.0
    %2259 = vmatpush1.msra.mxu0 0.0
    %2260 = vmatprep.subr.mxu0 0.0
    %2261 = vmatpush1.msra.mxu0 0.0
    %2262 = vmatprep.subr.mxu0 0.0
    %2263 = vmatpush1.msra.mxu0 0.0
    %2264 = vmatprep.subr.mxu0 0.0
    %2265 = vmatpush1.msra.mxu0 0.0
    %2266 = vmatprep.subr.mxu0 0.0
    %2267 = vmatpush1.msra.mxu0 0.0
    %2268 = vmatprep.mubr.f32.mxu0 0.0
    %v2269 = vand.u32 %v2197, 4294901760
    %v2270 = vsub.f32 %v2197, %v2269
    %v2271 = vand.u32 %v2270, 4294901760
    %v2272 = vsub.f32 %v2270, %v2271
    %v2273 = vand.u32 %v2272, 4294901760
    %2274 = vmatmul.mubr.f32.gmra.mrb[0].mxu0 %v2273
    %v2275 = vpop.f32.mrb[0].mxu0
    %v2276 = vadd.f32 %v2194, %v2275
    %v2277 = vpop.f32.mrb[0].mxu0
    %2278 = vdwg.mxu0
    %2279 = vmatprep.subr.mxu0 0.0
    %v2280 = vand.u32 %v2201, 4294901760
    %v2281 = vsub.f32 %v2201, %v2280
    %v2282 = vand.u32 %v2281, 4294901760
    %v2283 = vsub.f32 %v2281, %v2282
    %v2284 = vand.u32 %v2283, 4294901760
    %2285 = vmatpush1.msra.mxu0 %v2284
    %2286 = vmatprep.subr.mxu0 0.0
    %2287 = vmatpush1.msra.mxu0 0.0
    %2288 = vmatprep.subr.mxu0 0.0
    %2289 = vmatpush1.msra.mxu0 0.0
    %2290 = vmatprep.subr.mxu0 0.0
    %2291 = vmatpush1.msra.mxu0 0.0
    %2292 = vmatprep.subr.mxu0 0.0
    %2293 = vmatpush1.msra.mxu0 0.0
    %2294 = vmatprep.subr.mxu0 0.0
    %2295 = vmatpush1.msra.mxu0 0.0
    %2296 = vmatprep.subr.mxu0 0.0
    %2297 = vmatpush1.msra.mxu0 0.0
    %2298 = vmatprep.subr.mxu0 0.0
    %2299 = vmatpush1.msra.mxu0 0.0
    %2300 = vmatprep.subr.mxu0 0.0
    %2301 = vmatpush1.msra.mxu0 0.0
    %2302 = vmatprep.subr.mxu0 0.0
    %2303 = vmatpush1.msra.mxu0 0.0
    %2304 = vmatprep.subr.mxu0 0.0
    %2305 = vmatpush1.msra.mxu0 0.0
    %2306 = vmatprep.subr.mxu0 0.0
    %2307 = vmatpush1.msra.mxu0 0.0
    %2308 = vmatprep.subr.mxu0 0.0
    %2309 = vmatpush1.msra.mxu0 0.0
    %2310 = vmatprep.subr.mxu0 0.0
    %2311 = vmatpush1.msra.mxu0 0.0
    %2312 = vmatprep.subr.mxu0 0.0
    %2313 = vmatpush1.msra.mxu0 0.0
    %2314 = vmatprep.subr.mxu0 0.0
    %2315 = vmatpush1.msra.mxu0 0.0
    %2316 = vmatprep.subr.mxu0 0.0
    %2317 = vmatpush1.msra.mxu0 0.0
    %2318 = vmatprep.subr.mxu0 0.0
    %2319 = vmatpush1.msra.mxu0 0.0
    %2320 = vmatprep.subr.mxu0 0.0
    %2321 = vmatpush1.msra.mxu0 0.0
    %2322 = vmatprep.subr.mxu0 0.0
    %2323 = vmatpush1.msra.mxu0 0.0
    %2324 = vmatprep.subr.mxu0 0.0
    %2325 = vmatpush1.msra.mxu0 0.0
    %2326 = vmatprep.subr.mxu0 0.0
    %2327 = vmatpush1.msra.mxu0 0.0
    %2328 = vmatprep.subr.mxu0 0.0
    %2329 = vmatpush1.msra.mxu0 0.0
    %2330 = vmatprep.subr.mxu0 0.0
    %2331 = vmatpush1.msra.mxu0 0.0
    %2332 = vmatprep.subr.mxu0 0.0
    %2333 = vmatpush1.msra.mxu0 0.0
    %2334 = vmatprep.subr.mxu0 0.0
    %2335 = vmatpush1.msra.mxu0 0.0
    %2336 = vmatprep.subr.mxu0 0.0
    %2337 = vmatpush1.msra.mxu0 0.0
    %2338 = vmatprep.subr.mxu0 0.0
    %2339 = vmatpush1.msra.mxu0 0.0
    %2340 = vmatprep.subr.mxu0 0.0
    %2341 = vmatpush1.msra.mxu0 0.0
    %2342 = vmatprep.subr.mxu0 0.0
    %2343 = vmatpush1.msra.mxu0 0.0
    %2344 = vmatprep.subr.mxu0 0.0
    %2345 = vmatpush1.msra.mxu0 0.0
    %2346 = vmatprep.subr.mxu0 0.0
    %2347 = vmatpush1.msra.mxu0 0.0
    %2348 = vmatprep.mubr.f32.mxu0 0.0
    %v2349 = vand.u32 %v2197, 4294901760
    %2350 = vmatmul.mubr.f32.gmra.mrb[0].mxu0 %v2349
    %v2351 = vpop.f32.mrb[0].mxu0
    %v2352 = vadd.f32 %v2276, %v2351
    %v2353 = vpop.f32.mrb[0].mxu0
    %2354 = vdwg.mxu0
    %2355 = vmatprep.subr.mxu0 0.0
    %v2356 = vand.u32 %v2201, 4294901760
    %v2357 = vsub.f32 %v2201, %v2356
    %2358 = vmatpush1.msra.mxu0 %v2357
    %2359 = vmatprep.subr.mxu0 0.0
    %2360 = vmatpush1.msra.mxu0 0.0
    %2361 = vmatprep.subr.mxu0 0.0
    %2362 = vmatpush1.msra.mxu0 0.0
    %2363 = vmatprep.subr.mxu0 0.0
    %2364 = vmatpush1.msra.mxu0 0.0
    %2365 = vmatprep.subr.mxu0 0.0
    %2366 = vmatpush1.msra.mxu0 0.0
    %2367 = vmatprep.subr.mxu0 0.0
    %2368 = vmatpush1.msra.mxu0 0.0
    %2369 = vmatprep.subr.mxu0 0.0
    %2370 = vmatpush1.msra.mxu0 0.0
    %2371 = vmatprep.subr.mxu0 0.0
    %2372 = vmatpush1.msra.mxu0 0.0
    %2373 = vmatprep.subr.mxu0 0.0
    %2374 = vmatpush1.msra.mxu0 0.0
    %2375 = vmatprep.subr.mxu0 0.0
    %2376 = vmatpush1.msra.mxu0 0.0
    %2377 = vmatprep.subr.mxu0 0.0
    %2378 = vmatpush1.msra.mxu0 0.0
    %2379 = vmatprep.subr.mxu0 0.0
    %2380 = vmatpush1.msra.mxu0 0.0
    %2381 = vmatprep.subr.mxu0 0.0
    %2382 = vmatpush1.msra.mxu0 0.0
    %2383 = vmatprep.subr.mxu0 0.0
    %2384 = vmatpush1.msra.mxu0 0.0
    %2385 = vmatprep.subr.mxu0 0.0
    %2386 = vmatpush1.msra.mxu0 0.0
    %2387 = vmatprep.subr.mxu0 0.0
    %2388 = vmatpush1.msra.mxu0 0.0
    %2389 = vmatprep.subr.mxu0 0.0
    %2390 = vmatpush1.msra.mxu0 0.0
    %2391 = vmatprep.subr.mxu0 0.0
    %2392 = vmatpush1.msra.mxu0 0.0
    %2393 = vmatprep.subr.mxu0 0.0
    %2394 = vmatpush1.msra.mxu0 0.0
    %2395 = vmatprep.subr.mxu0 0.0
    %2396 = vmatpush1.msra.mxu0 0.0
    %2397 = vmatprep.subr.mxu0 0.0
    %2398 = vmatpush1.msra.mxu0 0.0
    %2399 = vmatprep.subr.mxu0 0.0
    %2400 = vmatpush1.msra.mxu0 0.0
    %2401 = vmatprep.subr.mxu0 0.0
    %2402 = vmatpush1.msra.mxu0 0.0
    %2403 = vmatprep.subr.mxu0 0.0
    %2404 = vmatpush1.msra.mxu0 0.0
    %2405 = vmatprep.subr.mxu0 0.0
    %2406 = vmatpush1.msra.mxu0 0.0
    %2407 = vmatprep.subr.mxu0 0.0
    %2408 = vmatpush1.msra.mxu0 0.0
    %2409 = vmatprep.subr.mxu0 0.0
    %2410 = vmatpush1.msra.mxu0 0.0
    %2411 = vmatprep.subr.mxu0 0.0
    %2412 = vmatpush1.msra.mxu0 0.0
    %2413 = vmatprep.subr.mxu0 0.0
    %2414 = vmatpush1.msra.mxu0 0.0
    %2415 = vmatprep.subr.mxu0 0.0
    %2416 = vmatpush1.msra.mxu0 0.0
    %2417 = vmatprep.subr.mxu0 0.0
    %2418 = vmatpush1.msra.mxu0 0.0
    %2419 = vmatprep.subr.mxu0 0.0
    %2420 = vmatpush1.msra.mxu0 0.0
    %2421 = vmatprep.mubr.f32.mxu0 0.0
    %v2422 = vand.u32 %v2197, 4294901760
    %v2423 = vsub.f32 %v2197, %v2422
    %2424 = vmatmul.mubr.f32.gmra.mrb[0].mxu0 %v2423
    %v2425 = vpop.f32.mrb[0].mxu0
    %v2426 = vadd.f32 %v2352, %v2425
    %v2427 = vpop.f32.mrb[0].mxu0
    %2428 = vdwg.mxu0
    %2429 = vmatprep.subr.mxu0 0.0
    %v2430 = vand.u32 %v2201, 4294901760
    %2431 = vmatpush1.msra.mxu0 %v2430
    %2432 = vmatprep.subr.mxu0 0.0
    %2433 = vmatpush1.msra.mxu0 0.0
    %2434 = vmatprep.subr.mxu0 0.0
    %2435 = vmatpush1.msra.mxu0 0.0
    %2436 = vmatprep.subr.mxu0 0.0
    %2437 = vmatpush1.msra.mxu0 0.0
    %2438 = vmatprep.subr.mxu0 0.0
    %2439 = vmatpush1.msra.mxu0 0.0
    %2440 = vmatprep.subr.mxu0 0.0
    %2441 = vmatpush1.msra.mxu0 0.0
    %2442 = vmatprep.subr.mxu0 0.0
    %2443 = vmatpush1.msra.mxu0 0.0
    %2444 = vmatprep.subr.mxu0 0.0
    %2445 = vmatpush1.msra.mxu0 0.0
    %2446 = vmatprep.subr.mxu0 0.0
    %2447 = vmatpush1.msra.mxu0 0.0
    %2448 = vmatprep.subr.mxu0 0.0
    %2449 = vmatpush1.msra.mxu0 0.0
    %2450 = vmatprep.subr.mxu0 0.0
    %2451 = vmatpush1.msra.mxu0 0.0
    %2452 = vmatprep.subr.mxu0 0.0
    %2453 = vmatpush1.msra.mxu0 0.0
    %2454 = vmatprep.subr.mxu0 0.0
    %2455 = vmatpush1.msra.mxu0 0.0
    %2456 = vmatprep.subr.mxu0 0.0
    %2457 = vmatpush1.msra.mxu0 0.0
    %2458 = vmatprep.subr.mxu0 0.0
    %2459 = vmatpush1.msra.mxu0 0.0
    %2460 = vmatprep.subr.mxu0 0.0
    %2461 = vmatpush1.msra.mxu0 0.0
    %2462 = vmatprep.subr.mxu0 0.0
    %2463 = vmatpush1.msra.mxu0 0.0
    %2464 = vmatprep.subr.mxu0 0.0
    %2465 = vmatpush1.msra.mxu0 0.0
    %2466 = vmatprep.subr.mxu0 0.0
    %2467 = vmatpush1.msra.mxu0 0.0
    %2468 = vmatprep.subr.mxu0 0.0
    %2469 = vmatpush1.msra.mxu0 0.0
    %2470 = vmatprep.subr.mxu0 0.0
    %2471 = vmatpush1.msra.mxu0 0.0
    %2472 = vmatprep.subr.mxu0 0.0
    %2473 = vmatpush1.msra.mxu0 0.0
    %2474 = vmatprep.subr.mxu0 0.0
    %2475 = vmatpush1.msra.mxu0 0.0
    %2476 = vmatprep.subr.mxu0 0.0
    %2477 = vmatpush1.msra.mxu0 0.0
    %2478 = vmatprep.subr.mxu0 0.0
    %2479 = vmatpush1.msra.mxu0 0.0
    %2480 = vmatprep.subr.mxu0 0.0
    %2481 = vmatpush1.msra.mxu0 0.0
    %2482 = vmatprep.subr.mxu0 0.0
    %2483 = vmatpush1.msra.mxu0 0.0
    %2484 = vmatprep.subr.mxu0 0.0
    %2485 = vmatpush1.msra.mxu0 0.0
    %2486 = vmatprep.subr.mxu0 0.0
    %2487 = vmatpush1.msra.mxu0 0.0
    %2488 = vmatprep.subr.mxu0 0.0
    %2489 = vmatpush1.msra.mxu0 0.0
    %2490 = vmatprep.subr.mxu0 0.0
    %2491 = vmatpush1.msra.mxu0 0.0
    %2492 = vmatprep.subr.mxu0 0.0
    %2493 = vmatpush1.msra.mxu0 0.0
    %2494 = vmatprep.mubr.f32.mxu0 0.0
    %v2495 = vand.u32 %v2197, 4294901760
    %v2496 = vsub.f32 %v2197, %v2495
    %v2497 = vand.u32 %v2496, 4294901760
    %2498 = vmatmul.mubr.f32.gmra.mrb[0].mxu0 %v2497
    %v2499 = vpop.f32.mrb[0].mxu0
    %v2500 = vadd.f32 %v2426, %v2499
    %v2501 = vpop.f32.mrb[0].mxu0
    %2502 = vdwg.mxu0
    %2503 = vmatprep.subr.mxu0 0.0
    %v2504 = vand.u32 %v2201, 4294901760
    %v2505 = vsub.f32 %v2201, %v2504
    %v2506 = vand.u32 %v2505, 4294901760
    %2507 = vmatpush1.msra.mxu0 %v2506
    %2508 = vmatprep.subr.mxu0 0.0
    %2509 = vmatpush1.msra.mxu0 0.0
    %2510 = vmatprep.subr.mxu0 0.0
    %2511 = vmatpush1.msra.mxu0 0.0
    %2512 = vmatprep.subr.mxu0 0.0
    %2513 = vmatpush1.msra.mxu0 0.0
    %2514 = vmatprep.subr.mxu0 0.0
    %2515 = vmatpush1.msra.mxu0 0.0
    %2516 = vmatprep.subr.mxu0 0.0
    %2517 = vmatpush1.msra.mxu0 0.0
    %2518 = vmatprep.subr.mxu0 0.0
    %2519 = vmatpush1.msra.mxu0 0.0
    %2520 = vmatprep.subr.mxu0 0.0
    %2521 = vmatpush1.msra.mxu0 0.0
    %2522 = vmatprep.subr.mxu0 0.0
    %2523 = vmatpush1.msra.mxu0 0.0
    %2524 = vmatprep.subr.mxu0 0.0
    %2525 = vmatpush1.msra.mxu0 0.0
    %2526 = vmatprep.subr.mxu0 0.0
    %2527 = vmatpush1.msra.mxu0 0.0
    %2528 = vmatprep.subr.mxu0 0.0
    %2529 = vmatpush1.msra.mxu0 0.0
    %2530 = vmatprep.subr.mxu0 0.0
    %2531 = vmatpush1.msra.mxu0 0.0
    %2532 = vmatprep.subr.mxu0 0.0
    %2533 = vmatpush1.msra.mxu0 0.0
    %2534 = vmatprep.subr.mxu0 0.0
    %2535 = vmatpush1.msra.mxu0 0.0
    %2536 = vmatprep.subr.mxu0 0.0
    %2537 = vmatpush1.msra.mxu0 0.0
    %2538 = vmatprep.subr.mxu0 0.0
    %2539 = vmatpush1.msra.mxu0 0.0
    %2540 = vmatprep.subr.mxu0 0.0
    %2541 = vmatpush1.msra.mxu0 0.0
    %2542 = vmatprep.subr.mxu0 0.0
    %2543 = vmatpush1.msra.mxu0 0.0
    %2544 = vmatprep.subr.mxu0 0.0
    %2545 = vmatpush1.msra.mxu0 0.0
    %2546 = vmatprep.subr.mxu0 0.0
    %2547 = vmatpush1.msra.mxu0 0.0
    %2548 = vmatprep.subr.mxu0 0.0
    %2549 = vmatpush1.msra.mxu0 0.0
    %2550 = vmatprep.subr.mxu0 0.0
    %2551 = vmatpush1.msra.mxu0 0.0
    %2552 = vmatprep.subr.mxu0 0.0
    %2553 = vmatpush1.msra.mxu0 0.0
    %2554 = vmatprep.subr.mxu0 0.0
    %2555 = vmatpush1.msra.mxu0 0.0
    %2556 = vmatprep.subr.mxu0 0.0
    %2557 = vmatpush1.msra.mxu0 0.0
    %2558 = vmatprep.subr.mxu0 0.0
    %2559 = vmatpush1.msra.mxu0 0.0
    %2560 = vmatprep.subr.mxu0 0.0
    %2561 = vmatpush1.msra.mxu0 0.0
    %2562 = vmatprep.subr.mxu0 0.0
    %2563 = vmatpush1.msra.mxu0 0.0
    %2564 = vmatprep.subr.mxu0 0.0
    %2565 = vmatpush1.msra.mxu0 0.0
    %2566 = vmatprep.subr.mxu0 0.0
    %2567 = vmatpush1.msra.mxu0 0.0
    %2568 = vmatprep.subr.mxu0 0.0
    %2569 = vmatpush1.msra.mxu0 0.0
    %2570 = vmatprep.mubr.f32.mxu0 0.0
    %v2571 = vand.u32 %v2197, 4294901760
    %2572 = vmatmul.mubr.f32.gmra.mrb[0].mxu0 %v2571
    %v2573 = vpop.f32.mrb[0].mxu0
    %v2574 = vadd.f32 %v2500, %v2573
    %v2575 = vpop.f32.mrb[0].mxu0
    %2576 = vdwg.mxu0
    %2577 = vmatprep.subr.mxu0 0.0
    %v2578 = vand.u32 %v2201, 4294901760
    %2579 = vmatpush1.msra.mxu0 %v2578
    %2580 = vmatprep.subr.mxu0 0.0
    %2581 = vmatpush1.msra.mxu0 0.0
    %2582 = vmatprep.subr.mxu0 0.0
    %2583 = vmatpush1.msra.mxu0 0.0
    %2584 = vmatprep.subr.mxu0 0.0
    %2585 = vmatpush1.msra.mxu0 0.0
    %2586 = vmatprep.subr.mxu0 0.0
    %2587 = vmatpush1.msra.mxu0 0.0
    %2588 = vmatprep.subr.mxu0 0.0
    %2589 = vmatpush1.msra.mxu0 0.0
    %2590 = vmatprep.subr.mxu0 0.0
    %2591 = vmatpush1.msra.mxu0 0.0
    %2592 = vmatprep.subr.mxu0 0.0
    %2593 = vmatpush1.msra.mxu0 0.0
    %2594 = vmatprep.subr.mxu0 0.0
    %2595 = vmatpush1.msra.mxu0 0.0
    %2596 = vmatprep.subr.mxu0 0.0
    %2597 = vmatpush1.msra.mxu0 0.0
    %2598 = vmatprep.subr.mxu0 0.0
    %2599 = vmatpush1.msra.mxu0 0.0
    %2600 = vmatprep.subr.mxu0 0.0
    %2601 = vmatpush1.msra.mxu0 0.0
    %2602 = vmatprep.subr.mxu0 0.0
    %2603 = vmatpush1.msra.mxu0 0.0
    %2604 = vmatprep.subr.mxu0 0.0
    %2605 = vmatpush1.msra.mxu0 0.0
    %2606 = vmatprep.subr.mxu0 0.0
    %2607 = vmatpush1.msra.mxu0 0.0
    %2608 = vmatprep.subr.mxu0 0.0
    %2609 = vmatpush1.msra.mxu0 0.0
    %2610 = vmatprep.subr.mxu0 0.0
    %2611 = vmatpush1.msra.mxu0 0.0
    %2612 = vmatprep.subr.mxu0 0.0
    %2613 = vmatpush1.msra.mxu0 0.0
    %2614 = vmatprep.subr.mxu0 0.0
    %2615 = vmatpush1.msra.mxu0 0.0
    %2616 = vmatprep.subr.mxu0 0.0
    %2617 = vmatpush1.msra.mxu0 0.0
    %2618 = vmatprep.subr.mxu0 0.0
    %2619 = vmatpush1.msra.mxu0 0.0
    %2620 = vmatprep.subr.mxu0 0.0
    %2621 = vmatpush1.msra.mxu0 0.0
    %2622 = vmatprep.subr.mxu0 0.0
    %2623 = vmatpush1.msra.mxu0 0.0
    %2624 = vmatprep.subr.mxu0 0.0
    %2625 = vmatpush1.msra.mxu0 0.0
    %2626 = vmatprep.subr.mxu0 0.0
    %2627 = vmatpush1.msra.mxu0 0.0
    %2628 = vmatprep.subr.mxu0 0.0
    %2629 = vmatpush1.msra.mxu0 0.0
    %2630 = vmatprep.subr.mxu0 0.0
    %2631 = vmatpush1.msra.mxu0 0.0
    %2632 = vmatprep.subr.mxu0 0.0
    %2633 = vmatpush1.msra.mxu0 0.0
    %2634 = vmatprep.subr.mxu0 0.0
    %2635 = vmatpush1.msra.mxu0 0.0
    %2636 = vmatprep.subr.mxu0 0.0
    %2637 = vmatpush1.msra.mxu0 0.0
    %2638 = vmatprep.subr.mxu0 0.0
    %2639 = vmatpush1.msra.mxu0 0.0
    %2640 = vmatprep.subr.mxu0 0.0
    %2641 = vmatpush1.msra.mxu0 0.0
    %2642 = vmatprep.mubr.f32.mxu0 0.0
    %v2643 = vand.u32 %v2197, 4294901760
    %2644 = vmatmul.mubr.f32.gmra.mrb[0].mxu0 %v2643
    %v2645 = vpop.f32.mrb[0].mxu0
    %v2646 = vadd.f32 %v2574, %v2645
    %v2647 = vpop.f32.mrb[0].mxu0
    %2648 = vdwg.mxu0
    %v2649 = vxor.u32 %v2646, 2147483648
    %v2650 = vmul.f32 %v2649, 1.442695
    %v2651 = vpow.pop %v2650
    %v2652 = vadd.f32 %v2651, 1.0
    %v2653 = vrcp.pop %v2652
    %v2654 = vmul.f32 1.0, %v2653
    %2655 = vst [vmem:[#allocation3] sm:$0x1] %v2654
    // Predicated region
    $region46: #{tpu_custom_call.1} parent=1 // pred_check
      _
    $region47: #{tpu_custom_call.1} parent=1 // pred_check_branch
      %2657 = sbr.rel (0) target = $region49
    $region48: #{tpu_custom_call.1} parent=1 // pred_region
      %s2659 = ssub.s32 16, 16
      %2660 = vsyncadd [#allocation4], %s2659
      %s2662 = sshll.u32 [#allocation3], 4
      %s2663 = int_to_ptr.vmem [resolvable:$true] %s2662
      %2665 = dma.vmem_to_hbm [thread:$0]  %s2663, 16, %s11, [#allocation4]
    $region49: #{tpu_custom_call.1} parent=1 // pred_fallthru
      _
    // Predicated region
    $region50: #{tpu_custom_call.1} parent=1 // pred_check
      _
    $region51: #{tpu_custom_call.1} parent=1 // pred_check_branch
      %2667 = sbr.rel (0) target = $region53
    $region52: #{tpu_custom_call.1} parent=1 // pred_region
      %2668 = dma.done [#allocation4], 16
    $region53: #{tpu_custom_call.1} parent=1 // pred_fallthru
      _
    %2669 = vsyncpa [#allocation4], 1

</llo_original>
